<compile_context>
chip_gen: v7x
topology: tpu7x:2x2x1
jax: 0.10.0
libtpu: 0.0.40
codegen_flags: <defaults>
</compile_context>

<pallas_src>
import functools

import jax
import jax.numpy as jnp
import numpy as np
from jax.experimental import pallas as pl
from jax.experimental.pallas import tpu as pltpu


def _resident_spec(shape):
    """BlockSpec for a grid-invariant (resident) operand.

    Single-buffered: the block index is constant across the grid, so double-buffering
    only doubles VMEM usage.  Falls back to a default BlockSpec if this jax build does
    not accept pipeline_mode.
    """
    index_map = lambda b, qi: (0,) * len(shape)
    try:
        return pl.BlockSpec(shape, index_map, pipeline_mode=pl.Buffered(1))
    except (TypeError, AttributeError):
        return pl.BlockSpec(shape, index_map)


# ----------------------------------------------------------------------------
# One fused kernel.  Grid = (batch, query-tile).
#   x_ref      : (1, N, C)                  full token sequence of this batch element
#   wqm_ref    : (C, hidden + heads*M)      [scale*W_q | folded mem-k logit columns]
#   wkv_ref    : (C, 2*hidden)              [W_k | W_v]
#   wout_ref   : (hidden, C)
#   bout_ref   : (1, C)
#   memv_ref   : (heads, M, D)              learned memory values
#   o_ref      : (1, TQ, C)                 output tile
#   kv_scr     : (N, 2*hidden) VMEM scratch, K/V of the whole sequence (param dtype)
# ----------------------------------------------------------------------------
def fused_attn_kernel(x_ref, wqm_ref, wkv_ref, wout_ref, bout_ref, memv_ref,
                      o_ref, kv_scr, *, heads, dim_head, num_mem, eps, block_q):
    hidden = heads * dim_head
    qi = pl.program_id(1)

    def layer_norm(x32):
        mu = jnp.mean(x32, axis=-1, keepdims=True)
        xc = x32 - mu
        var = jnp.mean(xc * xc, axis=-1, keepdims=True)
        return xc * jax.lax.rsqrt(var + eps)

    # ---- full-sequence K/V: computed once per batch element, reused by every q tile ----
    @pl.when(qi == 0)
    def _():
        xn_full = layer_norm(x_ref[0].astype(jnp.float32))                 # (N, C)
        w_kv = wkv_ref[...]
        kv_scr[...] = jnp.dot(xn_full.astype(w_kv.dtype), w_kv,
                              preferred_element_type=jnp.float32
                              ).astype(kv_scr.dtype)                       # (N, 2*hidden)

    # ---- current query tile ----
    row0 = pl.multiple_of(qi * block_q, block_q)
    x_t32 = x_ref[0, pl.ds(row0, block_q), :].astype(jnp.float32)          # (TQ, C)
    xn_t = layer_norm(x_t32)

    # One matmul gives pre-scaled q (hidden cols) AND the memory-key logits (heads*M cols)
    w_qm = wqm_ref[...]
    qm = jnp.dot(xn_t.astype(w_qm.dtype), w_qm,
                 preferred_element_type=jnp.float32)                       # (TQ, hidden + heads*M)

    kv = kv_scr[...]                                                       # (N, 2*hidden)
    dn = (((1,), (1,)), ((), ()))                                          # contract last dims

    outs = []
    for h in range(heads):
        lo = h * dim_head
        hi = lo + dim_head
        q_h = qm[:, lo:hi]                                                 # (TQ, D), pre-scaled
        sim_m = qm[:, hidden + h * num_mem: hidden + (h + 1) * num_mem]    # (TQ, M), pre-scaled
        k_h = kv[:, lo:hi]                                                 # (N, D)
        v_h = kv[:, hidden + lo: hidden + hi]                              # (N, D)

        sim_x = jax.lax.dot_general(q_h.astype(k_h.dtype), k_h, dn,
                                    preferred_element_type=jnp.float32)    # (TQ, N)

        # joint softmax over [memory keys ; sequence keys]
        row_max = jnp.maximum(jnp.max(sim_m, axis=-1, keepdims=True),
                              jnp.max(sim_x, axis=-1, keepdims=True))
        p_m = jnp.exp(sim_m - row_max)
        p_x = jnp.exp(sim_x - row_max)
        denom = (jnp.sum(p_m, axis=-1, keepdims=True) +
                 jnp.sum(p_x, axis=-1, keepdims=True))
        inv = pl.reciprocal(denom, approx=False)                           # exact: parity w/ torch

        mv = memv_ref[h]                                                   # (M, D)
        o_h = (jnp.dot(p_m.astype(mv.dtype), mv, preferred_element_type=jnp.float32) +
               jnp.dot(p_x.astype(v_h.dtype), v_h, preferred_element_type=jnp.float32)) * inv
        outs.append(o_h)                                                   # (TQ, D)

    # 'b h n d -> b n (h d)': lane-concat of heads, stays in vregs
    out_tok = jnp.concatenate(outs, axis=-1)                               # (TQ, hidden)

    # ---- output 1x1 conv + bias + residual (residual is the pre-norm x) ----
    w_out = wout_ref[...]
    y = jnp.dot(out_tok.astype(w_out.dtype), w_out,
                preferred_element_type=jnp.float32)                        # (TQ, C)
    y = y + bout_ref[...].astype(jnp.float32) + x_t32
    o_ref[0] = y.astype(o_ref.dtype)


def fused_attention(x_tok, w_qkv, w_out, b_out, mem_kv, *, heads, dim_head,
                    eps=1e-6, block_q=256):
    B, N, C = x_tok.shape
    hidden = heads * dim_head
    assert w_qkv.shape == (C, 3 * hidden) and w_out.shape == (hidden, C)
    M = mem_kv.shape[2]
    scale = dim_head ** (-0.5)

    block_q = min(block_q, N)
    # TODO(synk): pad the token dim if N % block_q != 0; CARE_Net bottleneck N is a power of 2.
    assert N % block_q == 0 and (block_q % 8 == 0 or block_q == N)
    n_q = N // block_q

    # ---- host-side weight prep (tiny; constant-folded when weights are static) ----
    w_q = w_qkv[:, :hidden] * scale                                        # pre-scale q
    w_kv = w_qkv[:, hidden:]                                               # (C, 2*hidden)
    mem_k = mem_kv[0]                                                      # (heads, M, D)
    mem_v = mem_kv[1]                                                      # (heads, M, D)
    # fold scale*W_q @ mem_k^T into extra projection columns: (C, heads*M), head-major
    w_mem = jnp.einsum('chd,hmd->chm', w_q.reshape(C, heads, dim_head), mem_k,
                       precision=jax.lax.Precision.HIGHEST).reshape(C, heads * M)
    w_qm = jnp.concatenate([w_q, w_mem], axis=-1)                          # (C, hidden + heads*M)

    param_dtype = w_kv.dtype                                               # bf16 weights -> bf16 MXU
    kernel = functools.partial(fused_attn_kernel, heads=heads, dim_head=dim_head,
                               num_mem=M, eps=eps, block_q=block_q)

    return pl.pallas_call(
        kernel,
        out_shape=jax.ShapeDtypeStruct((B, N, C), x_tok.dtype),
        grid=(B, n_q),
        in_specs=[
            pl.BlockSpec((1, N, C), lambda b, qi: (b, 0, 0)),              # x: re-DMA'd once per b
            _resident_spec((C, hidden + heads * M)),                       # w_qm
            _resident_spec((C, 2 * hidden)),                               # w_kv
            _resident_spec((hidden, C)),                                   # w_out
            _resident_spec((1, C)),                                        # b_out
            _resident_spec((heads, M, dim_head)),                          # mem_v
        ],
        out_specs=pl.BlockSpec((1, block_q, C), lambda b, qi: (b, qi, 0)),
        scratch_shapes=[pltpu.VMEM((N, 2 * hidden), param_dtype)],         # K/V of the sequence
        compiler_params=pltpu.CompilerParams(
            # batch axis parallel (megacore on v7x); q-tile axis must stay sequential
            # because kv_scr is filled at qi == 0 and reused by the later q tiles.
            dimension_semantics=("parallel", "arbitrary"),
            vmem_limit_bytes=48 * 1024 * 1024),
    )(x_tok, w_qm, w_kv, w_out, b_out, mem_v)


# ----------------------------------------------------------------------------
# Module forward: only the NCHW <-> token layout changes happen in XLA.
# ----------------------------------------------------------------------------
def attention_module_forward(x_nchw, params, *, heads, dim_head, block_q=256):
    b, c, h, w = x_nchw.shape
    n = h * w
    x_tok = jnp.transpose(x_nchw, (0, 2, 3, 1)).reshape(b, n, c)
    y_tok = fused_attention(x_tok, params["w_qkv"], params["w_out"],
                            params["b_out"], params["mem_kv"],
                            heads=heads, dim_head=dim_head, block_q=block_q)
    return jnp.transpose(y_tok.reshape(b, h, w, c), (0, 3, 1, 2))


# ----------------------------------------------------------------------------
# Pure-JAX reference for correctness (mirrors the PyTorch module).
# ----------------------------------------------------------------------------
def reference_forward(x_nchw, params, *, heads, dim_head):
    b, c, h, w = x_nchw.shape
    n = h * w
    x_tok = jnp.transpose(x_nchw, (0, 2, 3, 1)).reshape(b * n, c)
    mu = jnp.mean(x_tok, axis=-1, keepdims=True)
    var = jnp.mean((x_tok - mu) ** 2, axis=-1, keepdims=True)
    xn = (x_tok - mu) / jnp.sqrt(var + 1e-6)
    qkv = (xn @ params["w_qkv"]).reshape(b, n, 3, heads, dim_head)
    q = jnp.transpose(qkv[:, :, 0], (0, 2, 1, 3))
    k = jnp.transpose(qkv[:, :, 1], (0, 2, 1, 3))
    v = jnp.transpose(qkv[:, :, 2], (0, 2, 1, 3))
    mk = jnp.broadcast_to(params["mem_kv"][0][None], (b,) + params["mem_kv"][0].shape)
    mv = jnp.broadcast_to(params["mem_kv"][1][None], (b,) + params["mem_kv"][1].shape)
    k = jnp.concatenate([mk, k], axis=-2)
    v = jnp.concatenate([mv, v], axis=-2)
    sim = jnp.einsum('bhid,bhjd->bhij', q, k) * dim_head ** (-0.5)
    attn = jax.nn.softmax(sim, axis=-1)
    out = jnp.einsum('bhij,bhjd->bhid', attn, v)
    out_tok = jnp.transpose(out, (0, 2, 1, 3)).reshape(b * n, heads * dim_head)
    y_tok = out_tok @ params["w_out"] + params["b_out"] + x_tok
    return jnp.transpose(y_tok.reshape(b, h, w, c), (0, 3, 1, 2))


if __name__ == "__main__":
    # Small shapes consistent with the module (Attention defaults heads=4, dim_head=32).
    b, dim, H, W = 2, 64, 8, 8
    heads, dim_head, num_mem_kv = 4, 32, 4
    hidden = heads * dim_head

    key = jax.random.PRNGKey(0)
    k_x, k_mem, k_wqkv, k_wout, k_bout = jax.random.split(key, 5)

    x = jax.random.normal(k_x, (b, dim, H, W), dtype=jnp.float32)

    params = {
        # nn.Parameter(torch.randn(2, heads, num_mem_kv, dim_head))
        "mem_kv": jax.random.normal(k_mem, (2, heads, num_mem_kv, dim_head), jnp.float32),
        # to_qkv: Conv2d(dim, 3*hidden, 1, bias=False) -> stored as (dim, 3*hidden)
        "w_qkv": jax.random.normal(k_wqkv, (dim, 3 * hidden), jnp.float32) * 0.1,
        # to_out: Conv2d(hidden, dim, 1) -> stored as (hidden, dim) + bias (1, dim)
        "w_out": jax.random.normal(k_wout, (hidden, dim), jnp.float32) * 0.1,
        "b_out": jax.random.normal(k_bout, (1, dim), jnp.float32) * 0.1,
    }

    # block_q=32 gives a (B, N/block_q) = (2, 2) grid so the pipeline has >1 step per
    # batch element even at these tiny demo shapes (production block_q ~ 256).
    fwd = jax.jit(functools.partial(attention_module_forward,
                                    heads=heads, dim_head=dim_head, block_q=32))

    # f32 parameters: tight check against the pure-JAX reference.
    y = jax.block_until_ready(fwd(x, params))
    y_ref = reference_forward(x, params, heads=heads, dim_head=dim_head)
    assert y.shape == (b, dim, H, W)
    assert np.allclose(np.asarray(y), np.asarray(y_ref), rtol=2e-3, atol=2e-3)

    # bf16 parameters: exercises the bf16 MXU path (f32 accumulation keeps this to
    # expected quantization error; tolerance widened accordingly, per the review).
    params_bf16 = jax.tree_util.tree_map(lambda p: p.astype(jnp.bfloat16), params)
    y_bf16 = jax.block_until_ready(fwd(x, params_bf16))
    assert y_bf16.shape == (b, dim, H, W)
    assert np.allclose(np.asarray(y_bf16), np.asarray(y_ref), rtol=1e-1, atol=2e-1)

    print("KERNEL_OK")
</pallas_src>

<mosaic_0001>
module attributes {stable_mosaic.version = 11 : i64} {
  func.func @fused_attn_kernel(%arg0: i32, %arg1: i32, %arg2: memref<1x64x64xf32, #tpu.memory_space<vmem>>, %arg3: memref<64x144xf32, #tpu.memory_space<vmem>>, %arg4: memref<64x256xf32, #tpu.memory_space<vmem>>, %arg5: memref<128x64xf32, #tpu.memory_space<vmem>>, %arg6: memref<1x64xf32, #tpu.memory_space<vmem>>, %arg7: memref<4x4x32xf32, #tpu.memory_space<vmem>>, %arg8: memref<1x32x64xf32, #tpu.memory_space<vmem>>, %arg9: memref<64x256xf32, #tpu.memory_space<vmem>>) attributes {dimension_semantics = [#tpu.dimension_semantics<parallel>, #tpu.dimension_semantics<arbitrary>], iteration_bounds = array<i64: 2, 2>, scalar_prefetch = 0 : i64, scratch_operands = 1 : i64, tpu.core_type = #tpu.core_type<tc>, window_params = [{transform_indices = @transform_0, window_bounds = array<i64: 1, 64, 64>}, {pipeline_mode = #tpu.pipeline_mode<synchronous>, transform_indices = @transform_1, window_bounds = array<i64: 64, 144>}, {pipeline_mode = #tpu.pipeline_mode<synchronous>, transform_indices = @transform_2, window_bounds = array<i64: 64, 256>}, {pipeline_mode = #tpu.pipeline_mode<synchronous>, transform_indices = @transform_3, window_bounds = array<i64: 128, 64>}, {pipeline_mode = #tpu.pipeline_mode<synchronous>, transform_indices = @transform_4, window_bounds = array<i64: 1, 64>}, {pipeline_mode = #tpu.pipeline_mode<synchronous>, transform_indices = @transform_5, window_bounds = array<i64: 4, 4, 32>}, {transform_indices = @transform_6, window_bounds = array<i64: 1, 32, 64>}]} {
    %c0_i32 = arith.constant 0 : i32
    %0 = arith.cmpi eq, %arg1, %c0_i32 : i32
    %1 = arith.extui %0 : i1 to i32
    %c0_i32_0 = arith.constant 0 : i32
    %2 = arith.cmpi ne, %1, %c0_i32_0 : i32
    scf.if %2 {
      %c0_56 = arith.constant 0 : index
      %c0_57 = arith.constant 0 : index
      %c0_58 = arith.constant 0 : index
      %153 = vector.load %arg2[%c0_56, %c0_57, %c0_58] : memref<1x64x64xf32, #tpu.memory_space<vmem>>, vector<1x64x64xf32>
      %154 = vector.shape_cast %153 : vector<1x64x64xf32> to vector<64x64xf32>
      %cst_59 = arith.constant dense<0.000000e+00> : vector<64xf32>
      %155 = vector.multi_reduction <add>, %154, %cst_59 [1] : vector<64x64xf32> to vector<64xf32>
      %156 = vector.shape_cast %155 : vector<64xf32> to vector<64x1xf32>
      %cst_60 = arith.constant 6.400000e+01 : f32
      %157 = vector.broadcast %cst_60 : f32 to vector<64x1xf32>
      %158 = arith.divf %156, %157 : vector<64x1xf32>
      %159 = vector.broadcast %158 : vector<64x1xf32> to vector<64x64xf32>
      %160 = arith.subf %154, %159 : vector<64x64xf32>
      %161 = arith.mulf %160, %160 : vector<64x64xf32>
      %cst_61 = arith.constant dense<0.000000e+00> : vector<64xf32>
      %162 = vector.multi_reduction <add>, %161, %cst_61 [1] : vector<64x64xf32> to vector<64xf32>
      %163 = vector.shape_cast %162 : vector<64xf32> to vector<64x1xf32>
      %cst_62 = arith.constant 6.400000e+01 : f32
      %164 = vector.broadcast %cst_62 : f32 to vector<64x1xf32>
      %165 = arith.divf %163, %164 : vector<64x1xf32>
      %cst_63 = arith.constant 9.99999997E-7 : f32
      %166 = vector.broadcast %cst_63 : f32 to vector<64x1xf32>
      %167 = arith.addf %165, %166 : vector<64x1xf32>
      %168 = math.rsqrt %167 : vector<64x1xf32>
      %169 = vector.broadcast %168 : vector<64x1xf32> to vector<64x64xf32>
      %170 = arith.mulf %160, %169 : vector<64x64xf32>
      %c0_64 = arith.constant 0 : index
      %c0_65 = arith.constant 0 : index
      %171 = vector.load %arg4[%c0_64, %c0_65] : memref<64x256xf32, #tpu.memory_space<vmem>>, vector<64x256xf32>
      %cst_66 = arith.constant dense<0.000000e+00> : vector<64x256xf32>
      %172 = tpu.matmul %170, %171, %cst_66 {dimension_numbers = #tpu.dot_dimension_numbers<[1], [0], [0], [1], [0, 0, 1, 1], [], []>} : vector<64x64xf32>, vector<64x256xf32>, vector<64x256xf32> -> vector<64x256xf32>
      %c0_67 = arith.constant 0 : index
      %c0_68 = arith.constant 0 : index
      %173 = vector.load %arg9[%c0_67, %c0_68] : memref<64x256xf32, #tpu.memory_space<vmem>>, vector<64x256xf32>
      tpu.vector_store %arg9[%c0_67, %c0_68], %172 {strides = array<i32>} : memref<64x256xf32, #tpu.memory_space<vmem>>, vector<64x256xf32>,
    } else {
    }
    %c32_i32 = arith.constant 32 : i32
    %3 = arith.muli %arg1, %c32_i32 : i32
    %4 = tpu.assume_multiple %3, 32 : i32
    %c0 = arith.constant 0 : index
    %5 = arith.index_cast %4 : i32 to index
    %c0_1 = arith.constant 0 : index
    %6 = vector.load %arg2[%c0, %5, %c0_1] : memref<1x64x64xf32, #tpu.memory_space<vmem>>, vector<1x32x64xf32>
    %7 = vector.shape_cast %6 : vector<1x32x64xf32> to vector<32x64xf32>
    %cst = arith.constant dense<0.000000e+00> : vector<32xf32>
    %8 = vector.multi_reduction <add>, %7, %cst [1] : vector<32x64xf32> to vector<32xf32>
    %9 = vector.shape_cast %8 : vector<32xf32> to vector<32x1xf32>
    %cst_2 = arith.constant 6.400000e+01 : f32
    %10 = vector.broadcast %cst_2 : f32 to vector<32x1xf32>
    %11 = arith.divf %9, %10 : vector<32x1xf32>
    %12 = vector.broadcast %11 : vector<32x1xf32> to vector<32x64xf32>
    %13 = arith.subf %7, %12 : vector<32x64xf32>
    %14 = arith.mulf %13, %13 : vector<32x64xf32>
    %cst_3 = arith.constant dense<0.000000e+00> : vector<32xf32>
    %15 = vector.multi_reduction <add>, %14, %cst_3 [1] : vector<32x64xf32> to vector<32xf32>
    %16 = vector.shape_cast %15 : vector<32xf32> to vector<32x1xf32>
    %cst_4 = arith.constant 6.400000e+01 : f32
    %17 = vector.broadcast %cst_4 : f32 to vector<32x1xf32>
    %18 = arith.divf %16, %17 : vector<32x1xf32>
    %cst_5 = arith.constant 9.99999997E-7 : f32
    %19 = vector.broadcast %cst_5 : f32 to vector<32x1xf32>
    %20 = arith.addf %18, %19 : vector<32x1xf32>
    %21 = math.rsqrt %20 : vector<32x1xf32>
    %22 = vector.broadcast %21 : vector<32x1xf32> to vector<32x64xf32>
    %23 = arith.mulf %13, %22 : vector<32x64xf32>
    %c0_6 = arith.constant 0 : index
    %c0_7 = arith.constant 0 : index
    %24 = vector.load %arg3[%c0_6, %c0_7] : memref<64x144xf32, #tpu.memory_space<vmem>>, vector<64x144xf32>
    %cst_8 = arith.constant dense<0.000000e+00> : vector<32x144xf32>
    %25 = tpu.matmul %23, %24, %cst_8 {dimension_numbers = #tpu.dot_dimension_numbers<[1], [0], [0], [1], [0, 0, 1, 1], [], []>} : vector<32x64xf32>, vector<64x144xf32>, vector<32x144xf32> -> vector<32x144xf32>
    %c0_9 = arith.constant 0 : index
    %c0_10 = arith.constant 0 : index
    %26 = vector.load %arg9[%c0_9, %c0_10] : memref<64x256xf32, #tpu.memory_space<vmem>>, vector<64x256xf32>
    %27 = vector.extract_strided_slice %25 {offsets = [0, 0], sizes = [32, 32], strides = [1, 1]} : vector<32x144xf32> to vector<32x32xf32>
    %28 = vector.extract_strided_slice %25 {offsets = [0, 128], sizes = [32, 4], strides = [1, 1]} : vector<32x144xf32> to vector<32x4xf32>
    %29 = vector.extract_strided_slice %26 {offsets = [0, 0], sizes = [64, 32], strides = [1, 1]} : vector<64x256xf32> to vector<64x32xf32>
    %30 = vector.extract_strided_slice %26 {offsets = [0, 128], sizes = [64, 32], strides = [1, 1]} : vector<64x256xf32> to vector<64x32xf32>
    %cst_11 = arith.constant dense<0.000000e+00> : vector<32x64xf32>
    %31 = tpu.matmul %27, %29, %cst_11 {dimension_numbers = #tpu.dot_dimension_numbers<[1], [1], [0], [0], [0, 0, 1, 0], [], []>} : vector<32x32xf32>, vector<64x32xf32>, vector<32x64xf32> -> vector<32x64xf32>
    %cst_12 = arith.constant dense<0xFF800000> : vector<32xf32>
    %32 = vector.multi_reduction <maximumf>, %28, %cst_12 [1] : vector<32x4xf32> to vector<32xf32>
    %33 = vector.shape_cast %32 : vector<32xf32> to vector<32x1xf32>
    %cst_13 = arith.constant dense<0xFF800000> : vector<32xf32>
    %34 = vector.multi_reduction <maximumf>, %31, %cst_13 [1] : vector<32x64xf32> to vector<32xf32>
    %35 = vector.shape_cast %34 : vector<32xf32> to vector<32x1xf32>
    %36 = arith.maximumf %33, %35 : vector<32x1xf32>
    %37 = vector.broadcast %36 : vector<32x1xf32> to vector<32x4xf32>
    %38 = arith.subf %28, %37 : vector<32x4xf32>
    %39 = math.exp %38 : vector<32x4xf32>
    %40 = vector.broadcast %36 : vector<32x1xf32> to vector<32x64xf32>
    %41 = arith.subf %31, %40 : vector<32x64xf32>
    %42 = math.exp %41 : vector<32x64xf32>
    %cst_14 = arith.constant dense<0.000000e+00> : vector<32xf32>
    %43 = vector.multi_reduction <add>, %39, %cst_14 [1] : vector<32x4xf32> to vector<32xf32>
    %44 = vector.shape_cast %43 : vector<32xf32> to vector<32x1xf32>
    %cst_15 = arith.constant dense<0.000000e+00> : vector<32xf32>
    %45 = vector.multi_reduction <add>, %42, %cst_15 [1] : vector<32x64xf32> to vector<32xf32>
    %46 = vector.shape_cast %45 : vector<32xf32> to vector<32x1xf32>
    %47 = arith.addf %44, %46 : vector<32x1xf32>
    %48 = tpu.reciprocal %47 : vector<32x1xf32> -> vector<32x1xf32>
    %c0_16 = arith.constant 0 : index
    %c0_17 = arith.constant 0 : index
    %c0_18 = arith.constant 0 : index
    %49 = vector.load %arg7[%c0_16, %c0_17, %c0_18] : memref<4x4x32xf32, #tpu.memory_space<vmem>>, vector<1x4x32xf32>
    %50 = vector.shape_cast %49 : vector<1x4x32xf32> to vector<4x32xf32>
    %cst_19 = arith.constant dense<0.000000e+00> : vector<32x32xf32>
    %51 = tpu.matmul %39, %50, %cst_19 {dimension_numbers = #tpu.dot_dimension_numbers<[1], [0], [0], [1], [0, 0, 1, 1], [], []>} : vector<32x4xf32>, vector<4x32xf32>, vector<32x32xf32> -> vector<32x32xf32>
    %cst_20 = arith.constant dense<0.000000e+00> : vector<32x32xf32>
    %52 = tpu.matmul %42, %30, %cst_20 {dimension_numbers = #tpu.dot_dimension_numbers<[1], [0], [0], [1], [0, 0, 1, 1], [], []>} : vector<32x64xf32>, vector<64x32xf32>, vector<32x32xf32> -> vector<32x32xf32>
    %53 = arith.addf %51, %52 : vector<32x32xf32>
    %54 = vector.broadcast %48 : vector<32x1xf32> to vector<32x32xf32>
    %55 = arith.mulf %53, %54 : vector<32x32xf32>
    %56 = vector.extract_strided_slice %25 {offsets = [0, 32], sizes = [32, 32], strides = [1, 1]} : vector<32x144xf32> to vector<32x32xf32>
    %57 = vector.extract_strided_slice %25 {offsets = [0, 132], sizes = [32, 4], strides = [1, 1]} : vector<32x144xf32> to vector<32x4xf32>
    %58 = vector.extract_strided_slice %26 {offsets = [0, 32], sizes = [64, 32], strides = [1, 1]} : vector<64x256xf32> to vector<64x32xf32>
    %59 = vector.extract_strided_slice %26 {offsets = [0, 160], sizes = [64, 32], strides = [1, 1]} : vector<64x256xf32> to vector<64x32xf32>
    %cst_21 = arith.constant dense<0.000000e+00> : vector<32x64xf32>
    %60 = tpu.matmul %56, %58, %cst_21 {dimension_numbers = #tpu.dot_dimension_numbers<[1], [1], [0], [0], [0, 0, 1, 0], [], []>} : vector<32x32xf32>, vector<64x32xf32>, vector<32x64xf32> -> vector<32x64xf32>
    %cst_22 = arith.constant dense<0xFF800000> : vector<32xf32>
    %61 = vector.multi_reduction <maximumf>, %57, %cst_22 [1] : vector<32x4xf32> to vector<32xf32>
    %62 = vector.shape_cast %61 : vector<32xf32> to vector<32x1xf32>
    %cst_23 = arith.constant dense<0xFF800000> : vector<32xf32>
    %63 = vector.multi_reduction <maximumf>, %60, %cst_23 [1] : vector<32x64xf32> to vector<32xf32>
    %64 = vector.shape_cast %63 : vector<32xf32> to vector<32x1xf32>
    %65 = arith.maximumf %62, %64 : vector<32x1xf32>
    %66 = vector.broadcast %65 : vector<32x1xf32> to vector<32x4xf32>
    %67 = arith.subf %57, %66 : vector<32x4xf32>
    %68 = math.exp %67 : vector<32x4xf32>
    %69 = vector.broadcast %65 : vector<32x1xf32> to vector<32x64xf32>
    %70 = arith.subf %60, %69 : vector<32x64xf32>
    %71 = math.exp %70 : vector<32x64xf32>
    %cst_24 = arith.constant dense<0.000000e+00> : vector<32xf32>
    %72 = vector.multi_reduction <add>, %68, %cst_24 [1] : vector<32x4xf32> to vector<32xf32>
    %73 = vector.shape_cast %72 : vector<32xf32> to vector<32x1xf32>
    %cst_25 = arith.constant dense<0.000000e+00> : vector<32xf32>
    %74 = vector.multi_reduction <add>, %71, %cst_25 [1] : vector<32x64xf32> to vector<32xf32>
    %75 = vector.shape_cast %74 : vector<32xf32> to vector<32x1xf32>
    %76 = arith.addf %73, %75 : vector<32x1xf32>
    %77 = tpu.reciprocal %76 : vector<32x1xf32> -> vector<32x1xf32>
    %c1 = arith.constant 1 : index
    %c0_26 = arith.constant 0 : index
    %c0_27 = arith.constant 0 : index
    %78 = vector.load %arg7[%c1, %c0_26, %c0_27] : memref<4x4x32xf32, #tpu.memory_space<vmem>>, vector<1x4x32xf32>
    %79 = vector.shape_cast %78 : vector<1x4x32xf32> to vector<4x32xf32>
    %cst_28 = arith.constant dense<0.000000e+00> : vector<32x32xf32>
    %80 = tpu.matmul %68, %79, %cst_28 {dimension_numbers = #tpu.dot_dimension_numbers<[1], [0], [0], [1], [0, 0, 1, 1], [], []>} : vector<32x4xf32>, vector<4x32xf32>, vector<32x32xf32> -> vector<32x32xf32>
    %cst_29 = arith.constant dense<0.000000e+00> : vector<32x32xf32>
    %81 = tpu.matmul %71, %59, %cst_29 {dimension_numbers = #tpu.dot_dimension_numbers<[1], [0], [0], [1], [0, 0, 1, 1], [], []>} : vector<32x64xf32>, vector<64x32xf32>, vector<32x32xf32> -> vector<32x32xf32>
    %82 = arith.addf %80, %81 : vector<32x32xf32>
    %83 = vector.broadcast %77 : vector<32x1xf32> to vector<32x32xf32>
    %84 = arith.mulf %82, %83 : vector<32x32xf32>
    %85 = vector.extract_strided_slice %25 {offsets = [0, 64], sizes = [32, 32], strides = [1, 1]} : vector<32x144xf32> to vector<32x32xf32>
    %86 = vector.extract_strided_slice %25 {offsets = [0, 136], sizes = [32, 4], strides = [1, 1]} : vector<32x144xf32> to vector<32x4xf32>
    %87 = vector.extract_strided_slice %26 {offsets = [0, 64], sizes = [64, 32], strides = [1, 1]} : vector<64x256xf32> to vector<64x32xf32>
    %88 = vector.extract_strided_slice %26 {offsets = [0, 192], sizes = [64, 32], strides = [1, 1]} : vector<64x256xf32> to vector<64x32xf32>
    %cst_30 = arith.constant dense<0.000000e+00> : vector<32x64xf32>
    %89 = tpu.matmul %85, %87, %cst_30 {dimension_numbers = #tpu.dot_dimension_numbers<[1], [1], [0], [0], [0, 0, 1, 0], [], []>} : vector<32x32xf32>, vector<64x32xf32>, vector<32x64xf32> -> vector<32x64xf32>
    %cst_31 = arith.constant dense<0xFF800000> : vector<32xf32>
    %90 = vector.multi_reduction <maximumf>, %86, %cst_31 [1] : vector<32x4xf32> to vector<32xf32>
    %91 = vector.shape_cast %90 : vector<32xf32> to vector<32x1xf32>
    %cst_32 = arith.constant dense<0xFF800000> : vector<32xf32>
    %92 = vector.multi_reduction <maximumf>, %89, %cst_32 [1] : vector<32x64xf32> to vector<32xf32>
    %93 = vector.shape_cast %92 : vector<32xf32> to vector<32x1xf32>
    %94 = arith.maximumf %91, %93 : vector<32x1xf32>
    %95 = vector.broadcast %94 : vector<32x1xf32> to vector<32x4xf32>
    %96 = arith.subf %86, %95 : vector<32x4xf32>
    %97 = math.exp %96 : vector<32x4xf32>
    %98 = vector.broadcast %94 : vector<32x1xf32> to vector<32x64xf32>
    %99 = arith.subf %89, %98 : vector<32x64xf32>
    %100 = math.exp %99 : vector<32x64xf32>
    %cst_33 = arith.constant dense<0.000000e+00> : vector<32xf32>
    %101 = vector.multi_reduction <add>, %97, %cst_33 [1] : vector<32x4xf32> to vector<32xf32>
    %102 = vector.shape_cast %101 : vector<32xf32> to vector<32x1xf32>
    %cst_34 = arith.constant dense<0.000000e+00> : vector<32xf32>
    %103 = vector.multi_reduction <add>, %100, %cst_34 [1] : vector<32x64xf32> to vector<32xf32>
    %104 = vector.shape_cast %103 : vector<32xf32> to vector<32x1xf32>
    %105 = arith.addf %102, %104 : vector<32x1xf32>
    %106 = tpu.reciprocal %105 : vector<32x1xf32> -> vector<32x1xf32>
    %c2 = arith.constant 2 : index
    %c0_35 = arith.constant 0 : index
    %c0_36 = arith.constant 0 : index
    %107 = vector.load %arg7[%c2, %c0_35, %c0_36] : memref<4x4x32xf32, #tpu.memory_space<vmem>>, vector<1x4x32xf32>
    %108 = vector.shape_cast %107 : vector<1x4x32xf32> to vector<4x32xf32>
    %cst_37 = arith.constant dense<0.000000e+00> : vector<32x32xf32>
    %109 = tpu.matmul %97, %108, %cst_37 {dimension_numbers = #tpu.dot_dimension_numbers<[1], [0], [0], [1], [0, 0, 1, 1], [], []>} : vector<32x4xf32>, vector<4x32xf32>, vector<32x32xf32> -> vector<32x32xf32>
    %cst_38 = arith.constant dense<0.000000e+00> : vector<32x32xf32>
    %110 = tpu.matmul %100, %88, %cst_38 {dimension_numbers = #tpu.dot_dimension_numbers<[1], [0], [0], [1], [0, 0, 1, 1], [], []>} : vector<32x64xf32>, vector<64x32xf32>, vector<32x32xf32> -> vector<32x32xf32>
    %111 = arith.addf %109, %110 : vector<32x32xf32>
    %112 = vector.broadcast %106 : vector<32x1xf32> to vector<32x32xf32>
    %113 = arith.mulf %111, %112 : vector<32x32xf32>
    %114 = vector.extract_strided_slice %25 {offsets = [0, 96], sizes = [32, 32], strides = [1, 1]} : vector<32x144xf32> to vector<32x32xf32>
    %115 = vector.extract_strided_slice %25 {offsets = [0, 140], sizes = [32, 4], strides = [1, 1]} : vector<32x144xf32> to vector<32x4xf32>
    %116 = vector.extract_strided_slice %26 {offsets = [0, 96], sizes = [64, 32], strides = [1, 1]} : vector<64x256xf32> to vector<64x32xf32>
    %117 = vector.extract_strided_slice %26 {offsets = [0, 224], sizes = [64, 32], strides = [1, 1]} : vector<64x256xf32> to vector<64x32xf32>
    %cst_39 = arith.constant dense<0.000000e+00> : vector<32x64xf32>
    %118 = tpu.matmul %114, %116, %cst_39 {dimension_numbers = #tpu.dot_dimension_numbers<[1], [1], [0], [0], [0, 0, 1, 0], [], []>} : vector<32x32xf32>, vector<64x32xf32>, vector<32x64xf32> -> vector<32x64xf32>
    %cst_40 = arith.constant dense<0xFF800000> : vector<32xf32>
    %119 = vector.multi_reduction <maximumf>, %115, %cst_40 [1] : vector<32x4xf32> to vector<32xf32>
    %120 = vector.shape_cast %119 : vector<32xf32> to vector<32x1xf32>
    %cst_41 = arith.constant dense<0xFF800000> : vector<32xf32>
    %121 = vector.multi_reduction <maximumf>, %118, %cst_41 [1] : vector<32x64xf32> to vector<32xf32>
    %122 = vector.shape_cast %121 : vector<32xf32> to vector<32x1xf32>
    %123 = arith.maximumf %120, %122 : vector<32x1xf32>
    %124 = vector.broadcast %123 : vector<32x1xf32> to vector<32x4xf32>
    %125 = arith.subf %115, %124 : vector<32x4xf32>
    %126 = math.exp %125 : vector<32x4xf32>
    %127 = vector.broadcast %123 : vector<32x1xf32> to vector<32x64xf32>
    %128 = arith.subf %118, %127 : vector<32x64xf32>
    %129 = math.exp %128 : vector<32x64xf32>
    %cst_42 = arith.constant dense<0.000000e+00> : vector<32xf32>
    %130 = vector.multi_reduction <add>, %126, %cst_42 [1] : vector<32x4xf32> to vector<32xf32>
    %131 = vector.shape_cast %130 : vector<32xf32> to vector<32x1xf32>
    %cst_43 = arith.constant dense<0.000000e+00> : vector<32xf32>
    %132 = vector.multi_reduction <add>, %129, %cst_43 [1] : vector<32x64xf32> to vector<32xf32>
    %133 = vector.shape_cast %132 : vector<32xf32> to vector<32x1xf32>
    %134 = arith.addf %131, %133 : vector<32x1xf32>
    %135 = tpu.reciprocal %134 : vector<32x1xf32> -> vector<32x1xf32>
    %c3 = arith.constant 3 : index
    %c0_44 = arith.constant 0 : index
    %c0_45 = arith.constant 0 : index
    %136 = vector.load %arg7[%c3, %c0_44, %c0_45] : memref<4x4x32xf32, #tpu.memory_space<vmem>>, vector<1x4x32xf32>
    %137 = vector.shape_cast %136 : vector<1x4x32xf32> to vector<4x32xf32>
    %cst_46 = arith.constant dense<0.000000e+00> : vector<32x32xf32>
    %138 = tpu.matmul %126, %137, %cst_46 {dimension_numbers = #tpu.dot_dimension_numbers<[1], [0], [0], [1], [0, 0, 1, 1], [], []>} : vector<32x4xf32>, vector<4x32xf32>, vector<32x32xf32> -> vector<32x32xf32>
    %cst_47 = arith.constant dense<0.000000e+00> : vector<32x32xf32>
    %139 = tpu.matmul %129, %117, %cst_47 {dimension_numbers = #tpu.dot_dimension_numbers<[1], [0], [0], [1], [0, 0, 1, 1], [], []>} : vector<32x64xf32>, vector<64x32xf32>, vector<32x32xf32> -> vector<32x32xf32>
    %140 = arith.addf %138, %139 : vector<32x32xf32>
    %141 = vector.broadcast %135 : vector<32x1xf32> to vector<32x32xf32>
    %142 = arith.mulf %140, %141 : vector<32x32xf32>
    %143 = tpu.concatenate %55, %84, %113, %142 in 1 : vector<32x32xf32>, vector<32x32xf32>, vector<32x32xf32>, vector<32x32xf32> -> vector<32x128xf32>
    %c0_48 = arith.constant 0 : index
    %c0_49 = arith.constant 0 : index
    %144 = vector.load %arg5[%c0_48, %c0_49] : memref<128x64xf32, #tpu.memory_space<vmem>>, vector<128x64xf32>
    %cst_50 = arith.constant dense<0.000000e+00> : vector<32x64xf32>
    %145 = tpu.matmul %143, %144, %cst_50 {dimension_numbers = #tpu.dot_dimension_numbers<[1], [0], [0], [1], [0, 0, 1, 1], [], []>} : vector<32x128xf32>, vector<128x64xf32>, vector<32x64xf32> -> vector<32x64xf32>
    %c0_51 = arith.constant 0 : index
    %c0_52 = arith.constant 0 : index
    %146 = vector.load %arg6[%c0_51, %c0_52] : memref<1x64xf32, #tpu.memory_space<vmem>>, vector<1x64xf32>
    %147 = vector.broadcast %146 : vector<1x64xf32> to vector<32x64xf32>
    %148 = arith.addf %145, %147 : vector<32x64xf32>
    %149 = arith.addf %148, %7 : vector<32x64xf32>
    %c0_53 = arith.constant 0 : index
    %c0_54 = arith.constant 0 : index
    %c0_55 = arith.constant 0 : index
    %150 = vector.load %arg8[%c0_53, %c0_54, %c0_55] : memref<1x32x64xf32, #tpu.memory_space<vmem>>, vector<1x32x64xf32>
    %151 = vector.shape_cast %150 : vector<1x32x64xf32> to vector<32x64xf32>
    %152 = vector.shape_cast %149 : vector<32x64xf32> to vector<1x32x64xf32>
    tpu.vector_store %arg8[%c0_53, %c0_54, %c0_55], %152 {strides = array<i32>} : memref<1x32x64xf32, #tpu.memory_space<vmem>>, vector<1x32x64xf32>,
    return
  }
  func.func @transform_0(%arg0: i32, %arg1: i32) -> (i32, i32, i32) {
    %c0_i32 = arith.constant 0 : i32
    %c0_i32_0 = arith.constant 0 : i32
    %c0_i32_1 = arith.constant 0 : i32
    return %arg0, %c0_i32, %c0_i32_0 : i32, i32, i32
  }
  func.func @transform_1(%arg0: i32, %arg1: i32) -> (i32, i32) {
    %c0_i32 = arith.constant 0 : i32
    %c0_i32_0 = arith.constant 0 : i32
    %c0_i32_1 = arith.constant 0 : i32
    return %c0_i32, %c0_i32_0 : i32, i32
  }
  func.func @transform_2(%arg0: i32, %arg1: i32) -> (i32, i32) {
    %c0_i32 = arith.constant 0 : i32
    %c0_i32_0 = arith.constant 0 : i32
    %c0_i32_1 = arith.constant 0 : i32
    return %c0_i32, %c0_i32_0 : i32, i32
  }
  func.func @transform_3(%arg0: i32, %arg1: i32) -> (i32, i32) {
    %c0_i32 = arith.constant 0 : i32
    %c0_i32_0 = arith.constant 0 : i32
    %c0_i32_1 = arith.constant 0 : i32
    return %c0_i32, %c0_i32_0 : i32, i32
  }
  func.func @transform_4(%arg0: i32, %arg1: i32) -> (i32, i32) {
    %c0_i32 = arith.constant 0 : i32
    %c0_i32_0 = arith.constant 0 : i32
    %c0_i32_1 = arith.constant 0 : i32
    return %c0_i32, %c0_i32_0 : i32, i32
  }
  func.func @transform_5(%arg0: i32, %arg1: i32) -> (i32, i32, i32) {
    %c0_i32 = arith.constant 0 : i32
    %c0_i32_0 = arith.constant 0 : i32
    %c0_i32_1 = arith.constant 0 : i32
    %c0_i32_2 = arith.constant 0 : i32
    return %c0_i32, %c0_i32_0, %c0_i32_1 : i32, i32, i32
  }
  func.func @transform_6(%arg0: i32, %arg1: i32) -> (i32, i32, i32) {
    %c0_i32 = arith.constant 0 : i32
    %c0_i32_0 = arith.constant 0 : i32
    return %arg0, %arg1, %c0_i32 : i32, i32, i32
  }
}

</mosaic_0001>

<llo_original>
// kernel: attention_module_forward.1
$region0: #{attention_module_forward.1}
  #allocation0 [shape = 'u32[]', space=smem, size = 0x4, offset = 0x4, fixed_abs, tag = 'smem constant byte address 0x4 - core index']
  #allocation1 [shape = 'u32[144,128]{1,0:T(1,128)}', space=vmem, size = 0x12000, scoped, tag = 'internal scratch']
  #allocation2 [shape = 'f32[64,256]{1,0:T(8,128)}', space=vmem, size = 0x10000, scoped, tag = 'scratch operand']
  %s0 = inlined_call_operand.vmem [shape: f32[2,64,64], index: 0, kind: input, shape index: {}]
  %s1 = inlined_call_operand.vmem [shape: f32[64,144], index: 1, kind: input, shape index: {}]
  %s2 = inlined_call_operand.vmem [shape: f32[64,256], index: 2, kind: input, shape index: {}]
  %s3 = inlined_call_operand.vmem [shape: f32[128,64], index: 3, kind: input, shape index: {}]
  %s4 = inlined_call_operand.vmem [shape: f32[1,64], index: 4, kind: input, shape index: {}]
  %s5 = inlined_call_operand.vmem [shape: f32[4,4,32], index: 5, kind: input, shape index: {}]
  %s6 = inlined_call_operand.hbm [shape: f32[2,64,64], index: 6, kind: output, shape index: {}]
  %s7 = sld [smem:[#allocation0]]
  $region61: #{attention_module_forward.1} parent=0
    _
  %s9 = ssub.s32 1, %s7
  %s10 = scalar_select 0, %s9, %s7
  $region1: #{attention_module_forward.1} parent=0
    #allocation3 [shape = 'u8[32768]{0}', space=vmem, size = 0x8000, scoped, tag = 'output window, operand 0']
    #allocation4 [shape = 's32[2]{0}', space=sflag, size = 0x8, scoped, tag = 'scoped memory for attention_module_forward.1']
    %11 = vsyncpa [#allocation4], 0
    %s12 = scalar_lea.sflag [#allocation4], 1
    %13 = vsyncpa %s12, 0
    loop: start=0, step=1, limit=6
    $region2: #{attention_module_forward.1} parent=1 // loop_pre_header
      _
    $region3: #{attention_module_forward.1} parent=1 // loop_header
      %s15 = sphi 0, %s19
      %p16 = scmp.ge.s32.totalorder %s15, 6
      %s22 = sphi 0, %s34
      %s23 = sphi 0, %s30
      %s24 = sphi 0, %s22
      %s25 = sphi 0, %s23
      %s26 = sphi 0, %s24
      %s27 = sphi 0, %s25
      %s37 = sphi 0, %s39
      %s40 = sphi 0, %s37
      %s41 = sphi 0, %s40
      %s57 = sphi 0, %s41
      %s61 = sphi 0, %s61
      %s63 = sphi 0, %s61
      %s64 = sphi 0, %s63
      %s78 = sphi 0, %s64
      %s82 = sphi 0, %s82
      %s84 = sphi 0, %s82
      %s85 = sphi 0, %s84
      %s99 = sphi 0, %s85
      %s103 = sphi 0, %s103
      %s105 = sphi 0, %s103
      %s106 = sphi 0, %s105
      %s120 = sphi 0, %s106
      %s124 = sphi 0, %s124
      %s126 = sphi 0, %s124
      %s127 = sphi 0, %s126
      %s141 = sphi 0, %s127
      %s145 = sphi 0, %s145
      %s147 = sphi 0, %s145
      %s148 = sphi 0, %s147
      %s162 = sphi 0, %s148
      %s170 = sphi 0, %s172
      %s173 = sphi 0, %s170
      %s174 = sphi 0, %s173
      %s190 = sphi 0, %s174
    $region4: #{attention_module_forward.1} parent=1 // loop_header_branch
      %18 = sbr.rel (%p16) target = $region8
    $region5: #{attention_module_forward.1} parent=1 // loop_body
      %s20 = ssub.s32 %s15, 1
      %s21 = ssub.s32 %s15, 2
      %s28 = sadd.s32 1, %s23
      %p29 = scmp.ge.s32.totalorder %s28, 2
      %s30 = scalar_select %p29, 0, %s28
      %s31 = sadd.s32 1, %s22
      %s32 = scalar_select %p29, %s31, %s22
      %p33 = scmp.ge.s32.totalorder %s32, 2
      %s34 = scalar_select %p33, 0, %s32
      %s35 = ssub.s32 %s22, %s34
      %p36 = scmp.eq.s32.totalorder %s35, 0
      %s38 = sadd.s32 %s37, 1
      %s39 = scalar_select %p36, %s37, %s38
      %p42 = pneg %p36
      %p43 = scmp.eq.s32.totalorder %s15, 3
      %p44 = por %p42, %p43
      %p45 = scmp.ne.s32.totalorder %s37, %s40
      %p46 = scmp.eq.s32.totalorder %s15, 0
      %p47 = por %p45, %p46
      %p48 = scmp.ne.s32.totalorder %s37, %s40
      %p49 = scmp.eq.s32.totalorder %s20, 3
      %p50 = por %p48, %p49
      %p51 = scmp.ne.s32.totalorder %s40, %s41
      %p52 = scmp.eq.s32.totalorder %s20, 0
      %p53 = por %p51, %p52
      %p54 = scmp.ne.s32.totalorder %s40, %s41
      %p55 = scmp.eq.s32.totalorder %s21, 3
      %p56 = por %p54, %p55
      %p58 = scmp.ne.s32.totalorder %s41, %s57
      %p59 = scmp.eq.s32.totalorder %s21, 0
      %p60 = por %p58, %p59
      %s62 = sadd.s32 %s61, 1
      %p65 = scmp.eq.s32.totalorder %s15, 3
      %p66 = scmp.ne.s32.totalorder %s61, %s63
      %p67 = scmp.eq.s32.totalorder %s15, 0
      %p68 = por %p66, %p67
      %p69 = scmp.ne.s32.totalorder %s61, %s63
      %p70 = scmp.eq.s32.totalorder %s20, 3
      %p71 = por %p69, %p70
      %p72 = scmp.ne.s32.totalorder %s63, %s64
      %p73 = scmp.eq.s32.totalorder %s20, 0
      %p74 = por %p72, %p73
      %p75 = scmp.ne.s32.totalorder %s63, %s64
      %p76 = scmp.eq.s32.totalorder %s21, 3
      %p77 = por %p75, %p76
      %p79 = scmp.ne.s32.totalorder %s64, %s78
      %p80 = scmp.eq.s32.totalorder %s21, 0
      %p81 = por %p79, %p80
      %s83 = sadd.s32 %s82, 1
      %p86 = scmp.eq.s32.totalorder %s15, 3
      %p87 = scmp.ne.s32.totalorder %s82, %s84
      %p88 = scmp.eq.s32.totalorder %s15, 0
      %p89 = por %p87, %p88
      %p90 = scmp.ne.s32.totalorder %s82, %s84
      %p91 = scmp.eq.s32.totalorder %s20, 3
      %p92 = por %p90, %p91
      %p93 = scmp.ne.s32.totalorder %s84, %s85
      %p94 = scmp.eq.s32.totalorder %s20, 0
      %p95 = por %p93, %p94
      %p96 = scmp.ne.s32.totalorder %s84, %s85
      %p97 = scmp.eq.s32.totalorder %s21, 3
      %p98 = por %p96, %p97
      %p100 = scmp.ne.s32.totalorder %s85, %s99
      %p101 = scmp.eq.s32.totalorder %s21, 0
      %p102 = por %p100, %p101
      %s104 = sadd.s32 %s103, 1
      %p107 = scmp.eq.s32.totalorder %s15, 3
      %p108 = scmp.ne.s32.totalorder %s103, %s105
      %p109 = scmp.eq.s32.totalorder %s15, 0
      %p110 = por %p108, %p109
      %p111 = scmp.ne.s32.totalorder %s103, %s105
      %p112 = scmp.eq.s32.totalorder %s20, 3
      %p113 = por %p111, %p112
      %p114 = scmp.ne.s32.totalorder %s105, %s106
      %p115 = scmp.eq.s32.totalorder %s20, 0
      %p116 = por %p114, %p115
      %p117 = scmp.ne.s32.totalorder %s105, %s106
      %p118 = scmp.eq.s32.totalorder %s21, 3
      %p119 = por %p117, %p118
      %p121 = scmp.ne.s32.totalorder %s106, %s120
      %p122 = scmp.eq.s32.totalorder %s21, 0
      %p123 = por %p121, %p122
      %s125 = sadd.s32 %s124, 1
      %p128 = scmp.eq.s32.totalorder %s15, 3
      %p129 = scmp.ne.s32.totalorder %s124, %s126
      %p130 = scmp.eq.s32.totalorder %s15, 0
      %p131 = por %p129, %p130
      %p132 = scmp.ne.s32.totalorder %s124, %s126
      %p133 = scmp.eq.s32.totalorder %s20, 3
      %p134 = por %p132, %p133
      %p135 = scmp.ne.s32.totalorder %s126, %s127
      %p136 = scmp.eq.s32.totalorder %s20, 0
      %p137 = por %p135, %p136
      %p138 = scmp.ne.s32.totalorder %s126, %s127
      %p139 = scmp.eq.s32.totalorder %s21, 3
      %p140 = por %p138, %p139
      %p142 = scmp.ne.s32.totalorder %s127, %s141
      %p143 = scmp.eq.s32.totalorder %s21, 0
      %p144 = por %p142, %p143
      %s146 = sadd.s32 %s145, 1
      %p149 = scmp.eq.s32.totalorder %s15, 3
      %p150 = scmp.ne.s32.totalorder %s145, %s147
      %p151 = scmp.eq.s32.totalorder %s15, 0
      %p152 = por %p150, %p151
      %p153 = scmp.ne.s32.totalorder %s145, %s147
      %p154 = scmp.eq.s32.totalorder %s20, 3
      %p155 = por %p153, %p154
      %p156 = scmp.ne.s32.totalorder %s147, %s148
      %p157 = scmp.eq.s32.totalorder %s20, 0
      %p158 = por %p156, %p157
      %p159 = scmp.ne.s32.totalorder %s147, %s148
      %p160 = scmp.eq.s32.totalorder %s21, 3
      %p161 = por %p159, %p160
      %p163 = scmp.ne.s32.totalorder %s148, %s162
      %p164 = scmp.eq.s32.totalorder %s21, 0
      %p165 = por %p163, %p164
      %s166 = ssub.s32 %s22, %s34
      %s167 = ssub.s32 %s23, %s30
      %s168 = sor.u32 %s166, %s167
      %p169 = scmp.eq.s32.totalorder %s168, 0
      %s171 = sadd.s32 %s170, 1
      %s172 = scalar_select %p169, %s170, %s171
      %p175 = pneg %p169
      %p176 = scmp.eq.s32.totalorder %s15, 3
      %p177 = por %p175, %p176
      %p178 = scmp.ne.s32.totalorder %s170, %s173
      %p179 = scmp.eq.s32.totalorder %s15, 0
      %p180 = por %p178, %p179
      %p181 = scmp.ne.s32.totalorder %s170, %s173
      %p182 = scmp.eq.s32.totalorder %s20, 3
      %p183 = por %p181, %p182
      %p184 = scmp.ne.s32.totalorder %s173, %s174
      %p185 = scmp.eq.s32.totalorder %s20, 0
      %p186 = por %p184, %p185
      %p187 = scmp.ne.s32.totalorder %s173, %s174
      %p188 = scmp.eq.s32.totalorder %s21, 3
      %p189 = por %p187, %p188
      %p191 = scmp.ne.s32.totalorder %s174, %s190
      %p192 = scmp.eq.s32.totalorder %s21, 0
      %p193 = por %p191, %p192
      %p194 = scmp.le.s32.totalorder 1, %s15
      %p195 = scmp.lt.s32.totalorder %s15, 5
      %p196 = pnand %p194, %p195
      %p197 = pneg %p196
      // Predicated region
      $region9: #{attention_module_forward.1} parent=5 // pred_check
        _
      $region10: #{attention_module_forward.1} parent=5 // pred_check_branch
        %199 = sbr.rel (%p196) target = $region12
      $region11: #{attention_module_forward.1} parent=5 // pred_region
        %s200 = ssub.s32 %s15, 1
        // Predicated region
        $region13: #{attention_module_forward.1} parent=11 // pred_check
          %p201 = pneg %p74
        $region14: #{attention_module_forward.1} parent=11 // pred_check_branch
          %203 = sbr.rel (%p201) target = $region16
        $region15: #{attention_module_forward.1} parent=11 // pred_region
          _
        $region16: #{attention_module_forward.1} parent=11 // pred_fallthru
          _
        // Predicated region
        $region17: #{attention_module_forward.1} parent=11 // pred_check
          %p204 = pneg %p95
        $region18: #{attention_module_forward.1} parent=11 // pred_check_branch
          %206 = sbr.rel (%p204) target = $region20
        $region19: #{attention_module_forward.1} parent=11 // pred_region
          _
        $region20: #{attention_module_forward.1} parent=11 // pred_fallthru
          _
        // Predicated region
        $region21: #{attention_module_forward.1} parent=11 // pred_check
          %p207 = pneg %p116
        $region22: #{attention_module_forward.1} parent=11 // pred_check_branch
          %209 = sbr.rel (%p207) target = $region24
        $region23: #{attention_module_forward.1} parent=11 // pred_region
          _
        $region24: #{attention_module_forward.1} parent=11 // pred_fallthru
          _
        // Predicated region
        $region25: #{attention_module_forward.1} parent=11 // pred_check
          %p210 = pneg %p137
        $region26: #{attention_module_forward.1} parent=11 // pred_check_branch
          %212 = sbr.rel (%p210) target = $region28
        $region27: #{attention_module_forward.1} parent=11 // pred_region
          _
        $region28: #{attention_module_forward.1} parent=11 // pred_fallthru
          _
        // Predicated region
        $region29: #{attention_module_forward.1} parent=11 // pred_check
          %p213 = pneg %p158
        $region30: #{attention_module_forward.1} parent=11 // pred_check_branch
          %215 = sbr.rel (%p213) target = $region32
        $region31: #{attention_module_forward.1} parent=11 // pred_region
          _
        $region32: #{attention_module_forward.1} parent=11 // pred_fallthru
          _
      $region12: #{attention_module_forward.1} parent=5 // pred_fallthru
        _
      %p216 = scmp.lt.s32.totalorder %s15, 4
      // Predicated region
      $region33: #{attention_module_forward.1} parent=5 // pred_check
        %p217 = pneg %p216
      $region34: #{attention_module_forward.1} parent=5 // pred_check_branch
        %219 = sbr.rel (%p217) target = $region36
      $region35: #{attention_module_forward.1} parent=5 // pred_region
        // Predicated region
        $region37: #{attention_module_forward.1} parent=35 // pred_check
          %p220 = pneg %p47
        $region38: #{attention_module_forward.1} parent=35 // pred_check_branch
          %222 = sbr.rel (%p220) target = $region40
        $region39: #{attention_module_forward.1} parent=35 // pred_region
          %p223 = scmp.lt.s32.totalorder %s22, 1
          %s224 = scalar_select %p223, %s22, 1
          %s225 = smul.addr %s224, 8
          %s226 = smul.addr %s225, 8
          %s227 = scalar_lea.vmem %s0, %s226
        $region40: #{attention_module_forward.1} parent=35 // pred_fallthru
          _
      $region36: #{attention_module_forward.1} parent=5 // pred_fallthru
        _
      %p228 = scmp.le.s32.totalorder 1, %s15
      %p229 = scmp.lt.s32.totalorder %s15, 5
      %p230 = pnand %p228, %p229
      %p231 = pneg %p230
      // Predicated region
      $region41: #{attention_module_forward.1} parent=5 // pred_check
        _
      $region42: #{attention_module_forward.1} parent=5 // pred_check_branch
        %233 = sbr.rel (%p230) target = $region44
      $region43: #{attention_module_forward.1} parent=5 // pred_region
        %s234 = ssub.s32 %s15, 1
        %p235 = scmp.lt.s32.totalorder %s24, 1
        %s236 = scalar_select %p235, %s24, 1
        %s237 = smul.addr %s236, 8
        %s238 = smul.addr %s237, 8
        %s239 = scalar_lea.vmem %s0, %s238
        %p240 = pneg %p53
        %p241 = pneg %p50
        %p242 = pneg %p74
        %p243 = pneg %p71
        %p244 = pneg %p95
        %p245 = pneg %p92
        %p246 = pneg %p116
        %p247 = pneg %p113
        %p248 = pneg %p137
        %p249 = pneg %p134
        %p250 = pneg %p158
        %p251 = pneg %p155
        %p252 = pneg %p186
        %p253 = pneg %p183
        %s254 = sand.u32 %s173, 1
        %s255 = scalar_lea.sflag [#allocation4], %s254
        %s256 = sand.u32 %s173, 1
        %s257 = smul.addr %s256, 32
        %s258 = scalar_lea.vmem [#allocation3], %s257
        %p259 = scmp.lt.s32.totalorder %s24, 1
        %s260 = scalar_select %p259, %s24, 1
        %s261 = smul.addr %s260, 8
        %s262 = smul.addr %s261, 8
        %s263 = scalar_lea.vmem %s0, %s262
        %s264 = smul.u32 4, %s25
        %p265 = scmp.eq.s32.totalorder %s25, 0
        // Predicated region
        $region45: #{attention_module_forward.1} parent=43 // pred_check
          %p266 = pneg %p265
        $region46: #{attention_module_forward.1} parent=43 // pred_check_branch
          %268 = sbr.rel (%p266) target = $region48
        $region47: #{attention_module_forward.1} parent=43 // pred_region
          %v269 = vld [vmem:[%s263] sm:$0xff]
          %v270 = vld [vmem:[%s263 + $0x8] sm:$0xff]
          %v271 = vld [vmem:[%s263 + $0x10] sm:$0xff]
          %v272 = vld [vmem:[%s263 + $0x18] sm:$0xff]
          %v273 = vld [vmem:[%s263 + $0x20] sm:$0xff]
          %v274 = vld [vmem:[%s263 + $0x28] sm:$0xff]
          %v275 = vld [vmem:[%s263 + $0x30] sm:$0xff]
          %v276 = vld [vmem:[%s263 + $0x38] sm:$0xff]
          %vm277 = vcmask 523264
          %v278 = vsel %vm277, %v269, 0.0
          %279 = vadd.xlane.f32.xlu0 %v278
          %v280 = vpop.xlane.xlu0 %279
          %v281 = vsel %vm277, %v270, 0.0
          %282 = vadd.xlane.f32.xlu0 %v281
          %v283 = vpop.xlane.xlu0 %282
          %v284 = vsel %vm277, %v271, 0.0
          %285 = vadd.xlane.f32.xlu0 %v284
          %v286 = vpop.xlane.xlu0 %285
          %v287 = vsel %vm277, %v272, 0.0
          %288 = vadd.xlane.f32.xlu0 %v287
          %v289 = vpop.xlane.xlu0 %288
          %v290 = vsel %vm277, %v273, 0.0
          %291 = vadd.xlane.f32.xlu0 %v290
          %v292 = vpop.xlane.xlu0 %291
          %v293 = vsel %vm277, %v274, 0.0
          %294 = vadd.xlane.f32.xlu0 %v293
          %v295 = vpop.xlane.xlu0 %294
          %v296 = vsel %vm277, %v275, 0.0
          %297 = vadd.xlane.f32.xlu0 %v296
          %v298 = vpop.xlane.xlu0 %297
          %v299 = vsel %vm277, %v276, 0.0
          %300 = vadd.xlane.f32.xlu0 %v299
          %v301 = vpop.xlane.xlu0 %300
          %v302 = vrcp.pop 64.0
          %v303 = vmul.f32 %v280, %v302
          %v304 = vmul.f32 %v283, %v302
          %v305 = vmul.f32 %v286, %v302
          %v306 = vmul.f32 %v289, %v302
          %v307 = vmul.f32 %v292, %v302
          %v308 = vmul.f32 %v295, %v302
          %v309 = vmul.f32 %v298, %v302
          %v310 = vmul.f32 %v301, %v302
          %v311 = vsub.f32 %v269, %v303
          %v312 = vsub.f32 %v270, %v304
          %v313 = vsub.f32 %v271, %v305
          %v314 = vsub.f32 %v272, %v306
          %v315 = vsub.f32 %v273, %v307
          %v316 = vsub.f32 %v274, %v308
          %v317 = vsub.f32 %v275, %v309
          %v318 = vsub.f32 %v276, %v310
          %v319 = vmul.f32 %v311, %v311
          %v320 = vmul.f32 %v312, %v312
          %v321 = vmul.f32 %v313, %v313
          %v322 = vmul.f32 %v314, %v314
          %v323 = vmul.f32 %v315, %v315
          %v324 = vmul.f32 %v316, %v316
          %v325 = vmul.f32 %v317, %v317
          %v326 = vmul.f32 %v318, %v318
          %v327 = vsel %vm277, %v319, 0.0
          %328 = vadd.xlane.f32.xlu0 %v327
          %v329 = vpop.xlane.xlu0 %328
          %v330 = vsel %vm277, %v320, 0.0
          %331 = vadd.xlane.f32.xlu0 %v330
          %v332 = vpop.xlane.xlu0 %331
          %v333 = vsel %vm277, %v321, 0.0
          %334 = vadd.xlane.f32.xlu0 %v333
          %v335 = vpop.xlane.xlu0 %334
          %v336 = vsel %vm277, %v322, 0.0
          %337 = vadd.xlane.f32.xlu0 %v336
          %v338 = vpop.xlane.xlu0 %337
          %v339 = vsel %vm277, %v323, 0.0
          %340 = vadd.xlane.f32.xlu0 %v339
          %v341 = vpop.xlane.xlu0 %340
          %v342 = vsel %vm277, %v324, 0.0
          %343 = vadd.xlane.f32.xlu0 %v342
          %v344 = vpop.xlane.xlu0 %343
          %v345 = vsel %vm277, %v325, 0.0
          %346 = vadd.xlane.f32.xlu0 %v345
          %v347 = vpop.xlane.xlu0 %346
          %v348 = vsel %vm277, %v326, 0.0
          %349 = vadd.xlane.f32.xlu0 %v348
          %v350 = vpop.xlane.xlu0 %349
          %v351 = vmul.f32 %v329, %v302
          %v352 = vmul.f32 %v332, %v302
          %v353 = vmul.f32 %v335, %v302
          %v354 = vmul.f32 %v338, %v302
          %v355 = vmul.f32 %v341, %v302
          %v356 = vmul.f32 %v344, %v302
          %v357 = vmul.f32 %v347, %v302
          %v358 = vmul.f32 %v350, %v302
          %v359 = vadd.f32 %v351, 1e-06
          %v360 = vadd.f32 %v352, 1e-06
          %v361 = vadd.f32 %v353, 1e-06
          %v362 = vadd.f32 %v354, 1e-06
          %v363 = vadd.f32 %v355, 1e-06
          %v364 = vadd.f32 %v356, 1e-06
          %v365 = vadd.f32 %v357, 1e-06
          %v366 = vadd.f32 %v358, 1e-06
          %v367 = vrsqrt.pop %v359
          %v368 = vrsqrt.pop %v360
          %v369 = vrsqrt.pop %v361
          %v370 = vrsqrt.pop %v362
          %v371 = vrsqrt.pop %v363
          %v372 = vrsqrt.pop %v364
          %v373 = vrsqrt.pop %v365
          %v374 = vrsqrt.pop %v366
          %v375 = vmul.f32 %v311, %v367
          %v376 = vmul.f32 %v312, %v368
          %v377 = vmul.f32 %v313, %v369
          %v378 = vmul.f32 %v314, %v370
          %v379 = vmul.f32 %v315, %v371
          %v380 = vmul.f32 %v316, %v372
          %v381 = vmul.f32 %v317, %v373
          %v382 = vmul.f32 %v318, %v374
          %v383 = vld [vmem:[%s2] sm:$0xff]
          %v384 = vld [vmem:[%s2 + $0x8] sm:$0xff]
          %v385 = vld [vmem:[%s2 + $0x10] sm:$0xff]
          %v386 = vld [vmem:[%s2 + $0x18] sm:$0xff]
          %v387 = vld [vmem:[%s2 + $0x20] sm:$0xff]
          %v388 = vld [vmem:[%s2 + $0x28] sm:$0xff]
          %v389 = vld [vmem:[%s2 + $0x30] sm:$0xff]
          %v390 = vld [vmem:[%s2 + $0x38] sm:$0xff]
          %v391 = vld [vmem:[%s2 + $0x40] sm:$0xff]
          %v392 = vld [vmem:[%s2 + $0x48] sm:$0xff]
          %v393 = vld [vmem:[%s2 + $0x50] sm:$0xff]
          %v394 = vld [vmem:[%s2 + $0x58] sm:$0xff]
          %v395 = vld [vmem:[%s2 + $0x60] sm:$0xff]
          %v396 = vld [vmem:[%s2 + $0x68] sm:$0xff]
          %v397 = vld [vmem:[%s2 + $0x70] sm:$0xff]
          %v398 = vld [vmem:[%s2 + $0x78] sm:$0xff]
          %v400 = vsel %vm277, %v375, 0
          %v403 = vsel %vm277, %v376, 0
          %v406 = vsel %vm277, %v377, 0
          %v409 = vsel %vm277, %v378, 0
          %v412 = vsel %vm277, %v379, 0
          %v415 = vsel %vm277, %v380, 0
          %v418 = vsel %vm277, %v381, 0
          %v421 = vsel %vm277, %v382, 0
          %423 = vmatprep.subr.mxu0 %v384
          %424 = vmatpush1.msra.mxu0 %v383
          %425 = vmatprep.subr.mxu0 %v386
          %426 = vmatpush1.msra.mxu0 %v385
          %427 = vmatprep.subr.mxu0 %v388
          %428 = vmatpush1.msra.mxu0 %v387
          %429 = vmatprep.subr.mxu0 %v390
          %430 = vmatpush1.msra.mxu0 %v389
          %431 = vmatprep.subr.mxu0 %v392
          %432 = vmatpush1.msra.mxu0 %v391
          %433 = vmatprep.subr.mxu0 %v394
          %434 = vmatpush1.msra.mxu0 %v393
          %435 = vmatprep.subr.mxu0 %v396
          %436 = vmatpush1.msra.mxu0 %v395
          %437 = vmatprep.subr.mxu0 %v398
          %438 = vmatpush1.msra.mxu0 %v397
          %439 = vmatprep.subr.mxu0 0.0
          %440 = vmatpush1.msra.mxu0 0.0
          %441 = vmatprep.subr.mxu0 0.0
          %442 = vmatpush1.msra.mxu0 0.0
          %443 = vmatprep.subr.mxu0 0.0
          %444 = vmatpush1.msra.mxu0 0.0
          %445 = vmatprep.subr.mxu0 0.0
          %446 = vmatpush1.msra.mxu0 0.0
          %447 = vmatprep.subr.mxu0 0.0
          %448 = vmatpush1.msra.mxu0 0.0
          %449 = vmatprep.subr.mxu0 0.0
          %450 = vmatpush1.msra.mxu0 0.0
          %451 = vmatprep.subr.mxu0 0.0
          %452 = vmatpush1.msra.mxu0 0.0
          %453 = vmatprep.subr.mxu0 0.0
          %454 = vmatpush1.msra.mxu0 0.0
          %455 = vmatprep.subr.mxu0 0.0
          %456 = vmatpush1.msra.mxu0 0.0
          %457 = vmatprep.subr.mxu0 0.0
          %458 = vmatpush1.msra.mxu0 0.0
          %459 = vmatprep.subr.mxu0 0.0
          %460 = vmatpush1.msra.mxu0 0.0
          %461 = vmatprep.subr.mxu0 0.0
          %462 = vmatpush1.msra.mxu0 0.0
          %463 = vmatprep.subr.mxu0 0.0
          %464 = vmatpush1.msra.mxu0 0.0
          %465 = vmatprep.subr.mxu0 0.0
          %466 = vmatpush1.msra.mxu0 0.0
          %467 = vmatprep.subr.mxu0 0.0
          %468 = vmatpush1.msra.mxu0 0.0
          %469 = vmatprep.subr.mxu0 0.0
          %470 = vmatpush1.msra.mxu0 0.0
          %471 = vmatprep.subr.mxu0 0.0
          %472 = vmatpush1.msra.mxu0 0.0
          %473 = vmatprep.subr.mxu0 0.0
          %474 = vmatpush1.msra.mxu0 0.0
          %475 = vmatprep.subr.mxu0 0.0
          %476 = vmatpush1.msra.mxu0 0.0
          %477 = vmatprep.subr.mxu0 0.0
          %478 = vmatpush1.msra.mxu0 0.0
          %479 = vmatprep.subr.mxu0 0.0
          %480 = vmatpush1.msra.mxu0 0.0
          %481 = vmatprep.subr.mxu0 0.0
          %482 = vmatpush1.msra.mxu0 0.0
          %483 = vmatprep.subr.mxu0 0.0
          %484 = vmatpush1.msra.mxu0 0.0
          %485 = vmatprep.subr.mxu0 0.0
          %486 = vmatpush1.msra.mxu0 0.0
          %487 = vmatprep.mubr.f32.mxu0 0.0
          %488 = vmatmul.mubr.f32.gmra.mrb[0].mxu0 %v400
          %v489 = vpop.f32.mrb[0].mxu0
          %v490 = vadd.f32 0.0, %v489
          %v491 = vpop.f32.mrb[0].mxu0
          %v492 = vadd.f32 0.0, %v491
          %493 = vmatprep.mubr.f32.mxu0 0.0
          %494 = vmatmul.mubr.f32.gmra.mrb[0].mxu0 %v403
          %v495 = vpop.f32.mrb[0].mxu0
          %v496 = vadd.f32 0.0, %v495
          %v497 = vpop.f32.mrb[0].mxu0
          %v498 = vadd.f32 0.0, %v497
          %499 = vmatprep.mubr.f32.mxu0 0.0
          %500 = vmatmul.mubr.f32.gmra.mrb[0].mxu0 %v406
          %v501 = vpop.f32.mrb[0].mxu0
          %v502 = vadd.f32 0.0, %v501
          %v503 = vpop.f32.mrb[0].mxu0
          %v504 = vadd.f32 0.0, %v503
          %505 = vmatprep.mubr.f32.mxu0 0.0
          %506 = vmatmul.mubr.f32.gmra.mrb[0].mxu0 %v409
          %v507 = vpop.f32.mrb[0].mxu0
          %v508 = vadd.f32 0.0, %v507
          %v509 = vpop.f32.mrb[0].mxu0
          %v510 = vadd.f32 0.0, %v509
          %511 = vmatprep.mubr.f32.mxu0 0.0
          %512 = vmatmul.mubr.f32.gmra.mrb[0].mxu0 %v412
          %v513 = vpop.f32.mrb[0].mxu0
          %v514 = vadd.f32 0.0, %v513
          %v515 = vpop.f32.mrb[0].mxu0
          %v516 = vadd.f32 0.0, %v515
          %517 = vmatprep.mubr.f32.mxu0 0.0
          %518 = vmatmul.mubr.f32.gmra.mrb[0].mxu0 %v415
          %v519 = vpop.f32.mrb[0].mxu0
          %v520 = vadd.f32 0.0, %v519
          %v521 = vpop.f32.mrb[0].mxu0
          %v522 = vadd.f32 0.0, %v521
          %523 = vmatprep.mubr.f32.mxu0 0.0
          %524 = vmatmul.mubr.f32.gmra.mrb[0].mxu0 %v418
          %v525 = vpop.f32.mrb[0].mxu0
          %v526 = vadd.f32 0.0, %v525
          %v527 = vpop.f32.mrb[0].mxu0
          %v528 = vadd.f32 0.0, %v527
          %529 = vmatprep.mubr.f32.mxu0 0.0
          %530 = vmatmul.mubr.f32.gmra.mrb[0].mxu0 %v421
          %v531 = vpop.f32.mrb[0].mxu0
          %v532 = vadd.f32 0.0, %v531
          %v533 = vpop.f32.mrb[0].mxu0
          %v534 = vadd.f32 0.0, %v533
          %535 = vdwg.mxu0
          %536 = vst [vmem:[#allocation2] sm:$0xff] %v490
          %537 = vst [vmem:[#allocation2 + $0x8] sm:$0xff] %v492
          %538 = vst [vmem:[#allocation2 + $0x10] sm:$0xff] %v496
          %539 = vst [vmem:[#allocation2 + $0x18] sm:$0xff] %v498
          %540 = vst [vmem:[#allocation2 + $0x20] sm:$0xff] %v502
          %541 = vst [vmem:[#allocation2 + $0x28] sm:$0xff] %v504
          %542 = vst [vmem:[#allocation2 + $0x30] sm:$0xff] %v508
          %543 = vst [vmem:[#allocation2 + $0x38] sm:$0xff] %v510
          %544 = vst [vmem:[#allocation2 + $0x40] sm:$0xff] %v514
          %545 = vst [vmem:[#allocation2 + $0x48] sm:$0xff] %v516
          %546 = vst [vmem:[#allocation2 + $0x50] sm:$0xff] %v520
          %547 = vst [vmem:[#allocation2 + $0x58] sm:$0xff] %v522
          %548 = vst [vmem:[#allocation2 + $0x60] sm:$0xff] %v526
          %549 = vst [vmem:[#allocation2 + $0x68] sm:$0xff] %v528
          %550 = vst [vmem:[#allocation2 + $0x70] sm:$0xff] %v532
          %551 = vst [vmem:[#allocation2 + $0x78] sm:$0xff] %v534
        $region48: #{attention_module_forward.1} parent=43 // pred_fallthru
          _
        %s552 = smul.u32 %s25, 32
        %s553 = scalar_lea.vmem %s263, %s552
        %v554 = vld [vmem:[%s553] sm:$0xff]
        %v555 = vld [vmem:[%s553 + $0x8] sm:$0xff]
        %v556 = vld [vmem:[%s553 + $0x10] sm:$0xff]
        %v557 = vld [vmem:[%s553 + $0x18] sm:$0xff]
        %vm558 = vcmask 523264
        %v559 = vsel %vm558, %v554, 0.0
        %560 = vadd.xlane.f32.xlu0 %v559
        %v561 = vpop.xlane.xlu0 %560
        %v562 = vsel %vm558, %v555, 0.0
        %563 = vadd.xlane.f32.xlu0 %v562
        %v564 = vpop.xlane.xlu0 %563
        %v565 = vsel %vm558, %v556, 0.0
        %566 = vadd.xlane.f32.xlu0 %v565
        %v567 = vpop.xlane.xlu0 %566
        %v568 = vsel %vm558, %v557, 0.0
        %569 = vadd.xlane.f32.xlu0 %v568
        %v570 = vpop.xlane.xlu0 %569
        %v571 = vrcp.pop 64.0
        %v572 = vmul.f32 %v561, %v571
        %v573 = vmul.f32 %v564, %v571
        %v574 = vmul.f32 %v567, %v571
        %v575 = vmul.f32 %v570, %v571
        %v576 = vsub.f32 %v554, %v572
        %v577 = vsub.f32 %v555, %v573
        %v578 = vsub.f32 %v556, %v574
        %v579 = vsub.f32 %v557, %v575
        %v580 = vmul.f32 %v576, %v576
        %v581 = vmul.f32 %v577, %v577
        %v582 = vmul.f32 %v578, %v578
        %v583 = vmul.f32 %v579, %v579
        %v584 = vsel %vm558, %v580, 0.0
        %585 = vadd.xlane.f32.xlu0 %v584
        %v586 = vpop.xlane.xlu0 %585
        %v587 = vsel %vm558, %v581, 0.0
        %588 = vadd.xlane.f32.xlu0 %v587
        %v589 = vpop.xlane.xlu0 %588
        %v590 = vsel %vm558, %v582, 0.0
        %591 = vadd.xlane.f32.xlu0 %v590
        %v592 = vpop.xlane.xlu0 %591
        %v593 = vsel %vm558, %v583, 0.0
        %594 = vadd.xlane.f32.xlu0 %v593
        %v595 = vpop.xlane.xlu0 %594
        %v596 = vmul.f32 %v586, %v571
        %v597 = vmul.f32 %v589, %v571
        %v598 = vmul.f32 %v592, %v571
        %v599 = vmul.f32 %v595, %v571
        %v600 = vadd.f32 %v596, 1e-06
        %v601 = vadd.f32 %v597, 1e-06
        %v602 = vadd.f32 %v598, 1e-06
        %v603 = vadd.f32 %v599, 1e-06
        %v604 = vrsqrt.pop %v600
        %v605 = vrsqrt.pop %v601
        %v606 = vrsqrt.pop %v602
        %v607 = vrsqrt.pop %v603
        %v608 = vmul.f32 %v576, %v604
        %v609 = vmul.f32 %v577, %v605
        %v610 = vmul.f32 %v578, %v606
        %v611 = vmul.f32 %v579, %v607
        %v612 = vld [vmem:[%s1] sm:$0xff]
        %v613 = vld [vmem:[%s1 + $0x8] sm:$0xff]
        %v614 = vld [vmem:[%s1 + $0x10] sm:$0xff]
        %v615 = vld [vmem:[%s1 + $0x18] sm:$0xff]
        %v616 = vld [vmem:[%s1 + $0x20] sm:$0xff]
        %v617 = vld [vmem:[%s1 + $0x28] sm:$0xff]
        %v618 = vld [vmem:[%s1 + $0x30] sm:$0xff]
        %v619 = vld [vmem:[%s1 + $0x38] sm:$0xff]
        %v620 = vld [vmem:[%s1 + $0x40] sm:$0xff]
        %v621 = vld [vmem:[%s1 + $0x48] sm:$0xff]
        %v622 = vld [vmem:[%s1 + $0x50] sm:$0xff]
        %v623 = vld [vmem:[%s1 + $0x58] sm:$0xff]
        %v624 = vld [vmem:[%s1 + $0x60] sm:$0xff]
        %v625 = vld [vmem:[%s1 + $0x68] sm:$0xff]
        %v626 = vld [vmem:[%s1 + $0x70] sm:$0xff]
        %v627 = vld [vmem:[%s1 + $0x78] sm:$0xff]
        %v629 = vsel %vm558, %v608, 0
        %v632 = vsel %vm558, %v609, 0
        %v635 = vsel %vm558, %v610, 0
        %v638 = vsel %vm558, %v611, 0
        %640 = vmatprep.subr.mxu0 %v613
        %641 = vmatpush1.msra.mxu0 %v612
        %642 = vmatprep.subr.mxu0 %v615
        %643 = vmatpush1.msra.mxu0 %v614
        %644 = vmatprep.subr.mxu0 %v617
        %645 = vmatpush1.msra.mxu0 %v616
        %646 = vmatprep.subr.mxu0 %v619
        %647 = vmatpush1.msra.mxu0 %v618
        %648 = vmatprep.subr.mxu0 %v621
        %649 = vmatpush1.msra.mxu0 %v620
        %650 = vmatprep.subr.mxu0 %v623
        %651 = vmatpush1.msra.mxu0 %v622
        %652 = vmatprep.subr.mxu0 %v625
        %653 = vmatpush1.msra.mxu0 %v624
        %654 = vmatprep.subr.mxu0 %v627
        %655 = vmatpush1.msra.mxu0 %v626
        %656 = vmatprep.subr.mxu0 0.0
        %657 = vmatpush1.msra.mxu0 0.0
        %658 = vmatprep.subr.mxu0 0.0
        %659 = vmatpush1.msra.mxu0 0.0
        %660 = vmatprep.subr.mxu0 0.0
        %661 = vmatpush1.msra.mxu0 0.0
        %662 = vmatprep.subr.mxu0 0.0
        %663 = vmatpush1.msra.mxu0 0.0
        %664 = vmatprep.subr.mxu0 0.0
        %665 = vmatpush1.msra.mxu0 0.0
        %666 = vmatprep.subr.mxu0 0.0
        %667 = vmatpush1.msra.mxu0 0.0
        %668 = vmatprep.subr.mxu0 0.0
        %669 = vmatpush1.msra.mxu0 0.0
        %670 = vmatprep.subr.mxu0 0.0
        %671 = vmatpush1.msra.mxu0 0.0
        %672 = vmatprep.subr.mxu0 0.0
        %673 = vmatpush1.msra.mxu0 0.0
        %674 = vmatprep.subr.mxu0 0.0
        %675 = vmatpush1.msra.mxu0 0.0
        %676 = vmatprep.subr.mxu0 0.0
        %677 = vmatpush1.msra.mxu0 0.0
        %678 = vmatprep.subr.mxu0 0.0
        %679 = vmatpush1.msra.mxu0 0.0
        %680 = vmatprep.subr.mxu0 0.0
        %681 = vmatpush1.msra.mxu0 0.0
        %682 = vmatprep.subr.mxu0 0.0
        %683 = vmatpush1.msra.mxu0 0.0
        %684 = vmatprep.subr.mxu0 0.0
        %685 = vmatpush1.msra.mxu0 0.0
        %686 = vmatprep.subr.mxu0 0.0
        %687 = vmatpush1.msra.mxu0 0.0
        %688 = vmatprep.subr.mxu0 0.0
        %689 = vmatpush1.msra.mxu0 0.0
        %690 = vmatprep.subr.mxu0 0.0
        %691 = vmatpush1.msra.mxu0 0.0
        %692 = vmatprep.subr.mxu0 0.0
        %693 = vmatpush1.msra.mxu0 0.0
        %694 = vmatprep.subr.mxu0 0.0
        %695 = vmatpush1.msra.mxu0 0.0
        %696 = vmatprep.subr.mxu0 0.0
        %697 = vmatpush1.msra.mxu0 0.0
        %698 = vmatprep.subr.mxu0 0.0
        %699 = vmatpush1.msra.mxu0 0.0
        %700 = vmatprep.subr.mxu0 0.0
        %701 = vmatpush1.msra.mxu0 0.0
        %702 = vmatprep.subr.mxu0 0.0
        %703 = vmatpush1.msra.mxu0 0.0
        %704 = vmatprep.mubr.f32.mxu0 0.0
        %705 = vmatmul.mubr.f32.gmra.mrb[0].mxu0 %v629
        %v706 = vpop.f32.mrb[0].mxu0
        %v707 = vadd.f32 0.0, %v706
        %v708 = vpop.f32.mrb[0].mxu0
        %v709 = vadd.f32 0.0, %v708
        %710 = vmatprep.mubr.f32.mxu0 0.0
        %711 = vmatmul.mubr.f32.gmra.mrb[0].mxu0 %v632
        %v712 = vpop.f32.mrb[0].mxu0
        %v713 = vadd.f32 0.0, %v712
        %v714 = vpop.f32.mrb[0].mxu0
        %v715 = vadd.f32 0.0, %v714
        %716 = vmatprep.mubr.f32.mxu0 0.0
        %717 = vmatmul.mubr.f32.gmra.mrb[0].mxu0 %v635
        %v718 = vpop.f32.mrb[0].mxu0
        %v719 = vadd.f32 0.0, %v718
        %v720 = vpop.f32.mrb[0].mxu0
        %v721 = vadd.f32 0.0, %v720
        %722 = vmatprep.mubr.f32.mxu0 0.0
        %723 = vmatmul.mubr.f32.gmra.mrb[0].mxu0 %v638
        %v724 = vpop.f32.mrb[0].mxu0
        %v725 = vadd.f32 0.0, %v724
        %v726 = vpop.f32.mrb[0].mxu0
        %v727 = vadd.f32 0.0, %v726
        %728 = vdwg.mxu0
        %v729 = vld [vmem:[#allocation2] sm:$0xff]
        %v730 = vld [vmem:[#allocation2 + $0x8] sm:$0xff]
        %v731 = vld [vmem:[#allocation2 + $0x10] sm:$0xff]
        %v732 = vld [vmem:[#allocation2 + $0x18] sm:$0xff]
        %v733 = vld [vmem:[#allocation2 + $0x20] sm:$0xff]
        %v734 = vld [vmem:[#allocation2 + $0x28] sm:$0xff]
        %v735 = vld [vmem:[#allocation2 + $0x30] sm:$0xff]
        %v736 = vld [vmem:[#allocation2 + $0x38] sm:$0xff]
        %v737 = vld [vmem:[#allocation2 + $0x40] sm:$0xff]
        %v738 = vld [vmem:[#allocation2 + $0x48] sm:$0xff]
        %v739 = vld [vmem:[#allocation2 + $0x50] sm:$0xff]
        %v740 = vld [vmem:[#allocation2 + $0x58] sm:$0xff]
        %v741 = vld [vmem:[#allocation2 + $0x60] sm:$0xff]
        %v742 = vld [vmem:[#allocation2 + $0x68] sm:$0xff]
        %v743 = vld [vmem:[#allocation2 + $0x70] sm:$0xff]
        %v744 = vld [vmem:[#allocation2 + $0x78] sm:$0xff]
        %vm745 = vcmask 261120
        %v747 = vsel %vm745, %v707, 0
        %v750 = vsel %vm745, %v713, 0
        %v753 = vsel %vm745, %v719, 0
        %v756 = vsel %vm745, %v725, 0
        %v759 = vsel %vm745, %v729, 0
        %v762 = vsel %vm745, %v731, 0
        %v765 = vsel %vm745, %v733, 0
        %v768 = vsel %vm745, %v735, 0
        %v771 = vsel %vm745, %v737, 0
        %v774 = vsel %vm745, %v739, 0
        %v777 = vsel %vm745, %v741, 0
        %v780 = vsel %vm745, %v743, 0
        %782 = vmatprep.subr.mxu0 0.0
        %783 = vmatpush1.xpose.msra.mxu0 %v759
        %784 = vmatprep.subr.mxu0 0.0
        %785 = vmatpush1.xpose.msra.mxu0 %v762
        %786 = vmatprep.subr.mxu0 0.0
        %787 = vmatpush1.xpose.msra.mxu0 %v765
        %788 = vmatprep.subr.mxu0 0.0
        %789 = vmatpush1.xpose.msra.mxu0 %v768
        %790 = vmatprep.subr.mxu0 0.0
        %791 = vmatpush1.xpose.msra.mxu0 %v771
        %792 = vmatprep.subr.mxu0 0.0
        %793 = vmatpush1.xpose.msra.mxu0 %v774
        %794 = vmatprep.subr.mxu0 0.0
        %795 = vmatpush1.xpose.msra.mxu0 %v777
        %796 = vmatprep.subr.mxu0 0.0
        %797 = vmatpush1.xpose.msra.mxu0 %v780
        %798 = vmatprep.subr.mxu0 0.0
        %799 = vmatpush1.xpose.msra.mxu0 0.0
        %800 = vmatprep.subr.mxu0 0.0
        %801 = vmatpush1.xpose.msra.mxu0 0.0
        %802 = vmatprep.subr.mxu0 0.0
        %803 = vmatpush1.xpose.msra.mxu0 0.0
        %804 = vmatprep.subr.mxu0 0.0
        %805 = vmatpush1.xpose.msra.mxu0 0.0
        %806 = vmatprep.subr.mxu0 0.0
        %807 = vmatpush1.xpose.msra.mxu0 0.0
        %808 = vmatprep.subr.mxu0 0.0
        %809 = vmatpush1.xpose.msra.mxu0 0.0
        %810 = vmatprep.subr.mxu0 0.0
        %811 = vmatpush1.xpose.msra.mxu0 0.0
        %812 = vmatprep.subr.mxu0 0.0
        %813 = vmatpush1.xpose.msra.mxu0 0.0
        %814 = vmatprep.subr.mxu0 0.0
        %815 = vmatpush1.xpose.msra.mxu0 0.0
        %816 = vmatprep.subr.mxu0 0.0
        %817 = vmatpush1.xpose.msra.mxu0 0.0
        %818 = vmatprep.subr.mxu0 0.0
        %819 = vmatpush1.xpose.msra.mxu0 0.0
        %820 = vmatprep.subr.mxu0 0.0
        %821 = vmatpush1.xpose.msra.mxu0 0.0
        %822 = vmatprep.subr.mxu0 0.0
        %823 = vmatpush1.xpose.msra.mxu0 0.0
        %824 = vmatprep.subr.mxu0 0.0
        %825 = vmatpush1.xpose.msra.mxu0 0.0
        %826 = vmatprep.subr.mxu0 0.0
        %827 = vmatpush1.xpose.msra.mxu0 0.0
        %828 = vmatprep.subr.mxu0 0.0
        %829 = vmatpush1.xpose.msra.mxu0 0.0
        %830 = vmatprep.subr.mxu0 0.0
        %831 = vmatpush1.xpose.msra.mxu0 0.0
        %832 = vmatprep.subr.mxu0 0.0
        %833 = vmatpush1.xpose.msra.mxu0 0.0
        %834 = vmatprep.subr.mxu0 0.0
        %835 = vmatpush1.xpose.msra.mxu0 0.0
        %836 = vmatprep.subr.mxu0 0.0
        %837 = vmatpush1.xpose.msra.mxu0 0.0
        %838 = vmatprep.subr.mxu0 0.0
        %839 = vmatpush1.xpose.msra.mxu0 0.0
        %840 = vmatprep.subr.mxu0 0.0
        %841 = vmatpush1.xpose.msra.mxu0 0.0
        %842 = vmatprep.subr.mxu0 0.0
        %843 = vmatpush1.xpose.msra.mxu0 0.0
        %844 = vmatprep.subr.mxu0 0.0
        %845 = vmatpush1.xpose.msra.mxu0 0.0
        %846 = vmatprep.mubr.f32.mxu0 0.0
        %847 = vmatmul.mubr.f32.gmra.mrb[0].mxu0 %v747
        %v848 = vpop.f32.mrb[0].mxu0
        %v849 = vadd.f32 0.0, %v848
        %v850 = vpop.f32.mrb[0].mxu0
        %851 = vmatprep.mubr.f32.mxu0 0.0
        %852 = vmatmul.mubr.f32.gmra.mrb[0].mxu0 %v750
        %v853 = vpop.f32.mrb[0].mxu0
        %v854 = vadd.f32 0.0, %v853
        %v855 = vpop.f32.mrb[0].mxu0
        %856 = vmatprep.mubr.f32.mxu0 0.0
        %857 = vmatmul.mubr.f32.gmra.mrb[0].mxu0 %v753
        %v858 = vpop.f32.mrb[0].mxu0
        %v859 = vadd.f32 0.0, %v858
        %v860 = vpop.f32.mrb[0].mxu0
        %861 = vmatprep.mubr.f32.mxu0 0.0
        %862 = vmatmul.mubr.f32.gmra.mrb[0].mxu0 %v756
        %v863 = vpop.f32.mrb[0].mxu0
        %v864 = vadd.f32 0.0, %v863
        %v865 = vpop.f32.mrb[0].mxu0
        %866 = vdwg.mxu0
        %vm867 = vcmask 31744
        %v868 = vsel %vm867, %v709, -inf
        %869 = vmax.xlane.f32.xlu0 %v868
        %v870 = vpop.xlane.xlu0 %869
        %v871 = vsel %vm867, %v715, -inf
        %872 = vmax.xlane.f32.xlu0 %v871
        %v873 = vpop.xlane.xlu0 %872
        %v874 = vsel %vm867, %v721, -inf
        %875 = vmax.xlane.f32.xlu0 %v874
        %v876 = vpop.xlane.xlu0 %875
        %v877 = vsel %vm867, %v727, -inf
        %878 = vmax.xlane.f32.xlu0 %v877
        %v879 = vpop.xlane.xlu0 %878
        %v880 = vsel %vm558, %v849, -inf
        %881 = vmax.xlane.f32.xlu0 %v880
        %v882 = vpop.xlane.xlu0 %881
        %v883 = vsel %vm558, %v854, -inf
        %884 = vmax.xlane.f32.xlu0 %v883
        %v885 = vpop.xlane.xlu0 %884
        %v886 = vsel %vm558, %v859, -inf
        %887 = vmax.xlane.f32.xlu0 %v886
        %v888 = vpop.xlane.xlu0 %887
        %v889 = vsel %vm558, %v864, -inf
        %890 = vmax.xlane.f32.xlu0 %v889
        %v891 = vpop.xlane.xlu0 %890
        %v892 = vmax.f32 %v870, %v882
        %v893 = vmax.f32 %v873, %v885
        %v894 = vmax.f32 %v876, %v888
        %v895 = vmax.f32 %v879, %v891
        %v896 = vsub.f32 %v709, %v892
        %v897 = vsub.f32 %v715, %v893
        %v898 = vsub.f32 %v721, %v894
        %v899 = vsub.f32 %v727, %v895
        %v900 = vmul.f32 %v896, 1.442695
        %v901 = vpow.pop %v900
        %v902 = vmul.f32 %v897, 1.442695
        %v903 = vpow.pop %v902
        %v904 = vmul.f32 %v898, 1.442695
        %v905 = vpow.pop %v904
        %v906 = vmul.f32 %v899, 1.442695
        %v907 = vpow.pop %v906
        %v908 = vsub.f32 %v849, %v892
        %v909 = vsub.f32 %v854, %v893
        %v910 = vsub.f32 %v859, %v894
        %v911 = vsub.f32 %v864, %v895
        %v912 = vmul.f32 %v908, 1.442695
        %v913 = vpow.pop %v912
        %v914 = vmul.f32 %v909, 1.442695
        %v915 = vpow.pop %v914
        %v916 = vmul.f32 %v910, 1.442695
        %v917 = vpow.pop %v916
        %v918 = vmul.f32 %v911, 1.442695
        %v919 = vpow.pop %v918
        %v920 = vsel %vm867, %v901, 0.0
        %921 = vadd.xlane.f32.xlu0 %v920
        %v922 = vpop.xlane.xlu0 %921
        %v923 = vsel %vm867, %v903, 0.0
        %924 = vadd.xlane.f32.xlu0 %v923
        %v925 = vpop.xlane.xlu0 %924
        %v926 = vsel %vm867, %v905, 0.0
        %927 = vadd.xlane.f32.xlu0 %v926
        %v928 = vpop.xlane.xlu0 %927
        %v929 = vsel %vm867, %v907, 0.0
        %930 = vadd.xlane.f32.xlu0 %v929
        %v931 = vpop.xlane.xlu0 %930
        %v932 = vsel %vm558, %v913, 0.0
        %933 = vadd.xlane.f32.xlu0 %v932
        %v934 = vpop.xlane.xlu0 %933
        %v935 = vsel %vm558, %v915, 0.0
        %936 = vadd.xlane.f32.xlu0 %v935
        %v937 = vpop.xlane.xlu0 %936
        %v938 = vsel %vm558, %v917, 0.0
        %939 = vadd.xlane.f32.xlu0 %v938
        %v940 = vpop.xlane.xlu0 %939
        %v941 = vsel %vm558, %v919, 0.0
        %942 = vadd.xlane.f32.xlu0 %v941
        %v943 = vpop.xlane.xlu0 %942
        %v944 = vadd.f32 %v922, %v934
        %v945 = vadd.f32 %v925, %v937
        %v946 = vadd.f32 %v928, %v940
        %v947 = vadd.f32 %v931, %v943
        %v948 = vrcp.pop %v944
        %v949 = vrcp.pop %v945
        %v950 = vrcp.pop %v946
        %v951 = vrcp.pop %v947
        %v952 = vld [vmem:[%s5] sm:$0xf]
        %v954 = vsel %vm558, %v913, 0
        %v957 = vsel %vm558, %v915, 0
        %v960 = vsel %vm558, %v917, 0
        %v963 = vsel %vm558, %v919, 0
        %965 = vmatprep.subr.mxu0 0.0
        %966 = vmatpush1.msra.mxu0 %v730
        %967 = vmatprep.subr.mxu0 0.0
        %968 = vmatpush1.msra.mxu0 %v732
        %969 = vmatprep.subr.mxu0 0.0
        %970 = vmatpush1.msra.mxu0 %v734
        %971 = vmatprep.subr.mxu0 0.0
        %972 = vmatpush1.msra.mxu0 %v736
        %973 = vmatprep.subr.mxu0 0.0
        %974 = vmatpush1.msra.mxu0 %v738
        %975 = vmatprep.subr.mxu0 0.0
        %976 = vmatpush1.msra.mxu0 %v740
        %977 = vmatprep.subr.mxu0 0.0
        %978 = vmatpush1.msra.mxu0 %v742
        %979 = vmatprep.subr.mxu0 0.0
        %980 = vmatpush1.msra.mxu0 %v744
        %981 = vmatprep.subr.mxu0 0.0
        %982 = vmatpush1.msra.mxu0 0.0
        %983 = vmatprep.subr.mxu0 0.0
        %984 = vmatpush1.msra.mxu0 0.0
        %985 = vmatprep.subr.mxu0 0.0
        %986 = vmatpush1.msra.mxu0 0.0
        %987 = vmatprep.subr.mxu0 0.0
        %988 = vmatpush1.msra.mxu0 0.0
        %989 = vmatprep.subr.mxu0 0.0
        %990 = vmatpush1.msra.mxu0 0.0
        %991 = vmatprep.subr.mxu0 0.0
        %992 = vmatpush1.msra.mxu0 0.0
        %993 = vmatprep.subr.mxu0 0.0
        %994 = vmatpush1.msra.mxu0 0.0
        %995 = vmatprep.subr.mxu0 0.0
        %996 = vmatpush1.msra.mxu0 0.0
        %997 = vmatprep.subr.mxu0 0.0
        %998 = vmatpush1.msra.mxu0 0.0
        %999 = vmatprep.subr.mxu0 0.0
        %1000 = vmatpush1.msra.mxu0 0.0
        %1001 = vmatprep.subr.mxu0 0.0
        %1002 = vmatpush1.msra.mxu0 0.0
        %1003 = vmatprep.subr.mxu0 0.0
        %1004 = vmatpush1.msra.mxu0 0.0
        %1005 = vmatprep.subr.mxu0 0.0
        %1006 = vmatpush1.msra.mxu0 0.0
        %1007 = vmatprep.subr.mxu0 0.0
        %1008 = vmatpush1.msra.mxu0 0.0
        %1009 = vmatprep.subr.mxu0 0.0
        %1010 = vmatpush1.msra.mxu0 0.0
        %1011 = vmatprep.subr.mxu0 0.0
        %1012 = vmatpush1.msra.mxu0 0.0
        %1013 = vmatprep.subr.mxu0 0.0
        %1014 = vmatpush1.msra.mxu0 0.0
        %1015 = vmatprep.subr.mxu0 0.0
        %1016 = vmatpush1.msra.mxu0 0.0
        %1017 = vmatprep.subr.mxu0 0.0
        %1018 = vmatpush1.msra.mxu0 0.0
        %1019 = vmatprep.subr.mxu0 0.0
        %1020 = vmatpush1.msra.mxu0 0.0
        %1021 = vmatprep.subr.mxu0 0.0
        %1022 = vmatpush1.msra.mxu0 0.0
        %1023 = vmatprep.subr.mxu0 0.0
        %1024 = vmatpush1.msra.mxu0 0.0
        %1025 = vmatprep.subr.mxu0 0.0
        %1026 = vmatpush1.msra.mxu0 0.0
        %1027 = vmatprep.subr.mxu0 0.0
        %1028 = vmatpush1.msra.mxu0 0.0
        %1029 = vmatprep.mubr.f32.mxu0 0.0
        %1030 = vmatmul.mubr.f32.gmra.mrb[0].mxu0 %v954
        %v1031 = vpop.f32.mrb[0].mxu0
        %v1032 = vadd.f32 0.0, %v1031
        %v1033 = vpop.f32.mrb[0].mxu0
        %1034 = vmatprep.mubr.f32.mxu0 0.0
        %1035 = vmatmul.mubr.f32.gmra.mrb[0].mxu0 %v957
        %v1036 = vpop.f32.mrb[0].mxu0
        %v1037 = vadd.f32 0.0, %v1036
        %v1038 = vpop.f32.mrb[0].mxu0
        %1039 = vmatprep.mubr.f32.mxu0 0.0
        %1040 = vmatmul.mubr.f32.gmra.mrb[0].mxu0 %v960
        %v1041 = vpop.f32.mrb[0].mxu0
        %v1042 = vadd.f32 0.0, %v1041
        %v1043 = vpop.f32.mrb[0].mxu0
        %1044 = vmatprep.mubr.f32.mxu0 0.0
        %1045 = vmatmul.mubr.f32.gmra.mrb[0].mxu0 %v963
        %v1046 = vpop.f32.mrb[0].mxu0
        %v1047 = vadd.f32 0.0, %v1046
        %v1048 = vpop.f32.mrb[0].mxu0
        %1049 = vdwg.mxu0
        %v1051 = vsel %vm867, %v901, 0
        %v1054 = vsel %vm867, %v903, 0
        %v1057 = vsel %vm867, %v905, 0
        %v1060 = vsel %vm867, %v907, 0
        %vm1062 = vcmask 1043456
        %v1064 = vsel %vm1062, %v952, 0
        %1066 = vmatprep.subr.mxu0 0.0
        %1067 = vmatpush1.msra.mxu0 %v1064
        %1068 = vmatprep.subr.mxu0 0.0
        %1069 = vmatpush1.msra.mxu0 0.0
        %1070 = vmatprep.subr.mxu0 0.0
        %1071 = vmatpush1.msra.mxu0 0.0
        %1072 = vmatprep.subr.mxu0 0.0
        %1073 = vmatpush1.msra.mxu0 0.0
        %1074 = vmatprep.subr.mxu0 0.0
        %1075 = vmatpush1.msra.mxu0 0.0
        %1076 = vmatprep.subr.mxu0 0.0
        %1077 = vmatpush1.msra.mxu0 0.0
        %1078 = vmatprep.subr.mxu0 0.0
        %1079 = vmatpush1.msra.mxu0 0.0
        %1080 = vmatprep.subr.mxu0 0.0
        %1081 = vmatpush1.msra.mxu0 0.0
        %1082 = vmatprep.subr.mxu0 0.0
        %1083 = vmatpush1.msra.mxu0 0.0
        %1084 = vmatprep.subr.mxu0 0.0
        %1085 = vmatpush1.msra.mxu0 0.0
        %1086 = vmatprep.subr.mxu0 0.0
        %1087 = vmatpush1.msra.mxu0 0.0
        %1088 = vmatprep.subr.mxu0 0.0
        %1089 = vmatpush1.msra.mxu0 0.0
        %1090 = vmatprep.subr.mxu0 0.0
        %1091 = vmatpush1.msra.mxu0 0.0
        %1092 = vmatprep.subr.mxu0 0.0
        %1093 = vmatpush1.msra.mxu0 0.0
        %1094 = vmatprep.subr.mxu0 0.0
        %1095 = vmatpush1.msra.mxu0 0.0
        %1096 = vmatprep.subr.mxu0 0.0
        %1097 = vmatpush1.msra.mxu0 0.0
        %1098 = vmatprep.subr.mxu0 0.0
        %1099 = vmatpush1.msra.mxu0 0.0
        %1100 = vmatprep.subr.mxu0 0.0
        %1101 = vmatpush1.msra.mxu0 0.0
        %1102 = vmatprep.subr.mxu0 0.0
        %1103 = vmatpush1.msra.mxu0 0.0
        %1104 = vmatprep.subr.mxu0 0.0
        %1105 = vmatpush1.msra.mxu0 0.0
        %1106 = vmatprep.subr.mxu0 0.0
        %1107 = vmatpush1.msra.mxu0 0.0
        %1108 = vmatprep.subr.mxu0 0.0
        %1109 = vmatpush1.msra.mxu0 0.0
        %1110 = vmatprep.subr.mxu0 0.0
        %1111 = vmatpush1.msra.mxu0 0.0
        %1112 = vmatprep.subr.mxu0 0.0
        %1113 = vmatpush1.msra.mxu0 0.0
        %1114 = vmatprep.subr.mxu0 0.0
        %1115 = vmatpush1.msra.mxu0 0.0
        %1116 = vmatprep.subr.mxu0 0.0
        %1117 = vmatpush1.msra.mxu0 0.0
        %1118 = vmatprep.subr.mxu0 0.0
        %1119 = vmatpush1.msra.mxu0 0.0
        %1120 = vmatprep.subr.mxu0 0.0
        %1121 = vmatpush1.msra.mxu0 0.0
        %1122 = vmatprep.subr.mxu0 0.0
        %1123 = vmatpush1.msra.mxu0 0.0
        %1124 = vmatprep.subr.mxu0 0.0
        %1125 = vmatpush1.msra.mxu0 0.0
        %1126 = vmatprep.subr.mxu0 0.0
        %1127 = vmatpush1.msra.mxu0 0.0
        %1128 = vmatprep.subr.mxu0 0.0
        %1129 = vmatpush1.msra.mxu0 0.0
        %1130 = vmatprep.mubr.f32.mxu0 0.0
        %1131 = vmatmul.mubr.f32.gmra.mrb[0].mxu0 %v1051
        %v1132 = vpop.f32.mrb[0].mxu0
        %v1133 = vadd.f32 %v1032, %v1132
        %v1134 = vpop.f32.mrb[0].mxu0
        %1135 = vmatprep.mubr.f32.mxu0 0.0
        %1136 = vmatmul.mubr.f32.gmra.mrb[0].mxu0 %v1054
        %v1137 = vpop.f32.mrb[0].mxu0
        %v1138 = vadd.f32 %v1037, %v1137
        %v1139 = vpop.f32.mrb[0].mxu0
        %1140 = vmatprep.mubr.f32.mxu0 0.0
        %1141 = vmatmul.mubr.f32.gmra.mrb[0].mxu0 %v1057
        %v1142 = vpop.f32.mrb[0].mxu0
        %v1143 = vadd.f32 %v1042, %v1142
        %v1144 = vpop.f32.mrb[0].mxu0
        %1145 = vmatprep.mubr.f32.mxu0 0.0
        %1146 = vmatmul.mubr.f32.gmra.mrb[0].mxu0 %v1060
        %v1147 = vpop.f32.mrb[0].mxu0
        %v1148 = vadd.f32 %v1047, %v1147
        %v1149 = vpop.f32.mrb[0].mxu0
        %1150 = vdwg.mxu0
        %v1151 = vmul.f32 %v1133, %v948
        %v1152 = vmul.f32 %v1138, %v949
        %v1153 = vmul.f32 %v1143, %v950
        %v1154 = vmul.f32 %v1148, %v951
        %1155 = vrot.lane.b32.xlu0 %v707, 96
        %v1156 = vpop.permute.xlu0 %1155
        %1157 = vrot.lane.b32.xlu0 %v713, 96
        %v1158 = vpop.permute.xlu0 %1157
        %1159 = vrot.lane.b32.xlu0 %v719, 96
        %v1160 = vpop.permute.xlu0 %1159
        %1161 = vrot.lane.b32.xlu0 %v725, 96
        %v1162 = vpop.permute.xlu0 %1161
        %1163 = vrot.lane.b32.xlu0 %v729, 96
        %v1164 = vpop.permute.xlu0 %1163
        %1165 = vrot.lane.b32.xlu0 %v731, 96
        %v1166 = vpop.permute.xlu0 %1165
        %1167 = vrot.lane.b32.xlu0 %v733, 96
        %v1168 = vpop.permute.xlu0 %1167
        %1169 = vrot.lane.b32.xlu0 %v735, 96
        %v1170 = vpop.permute.xlu0 %1169
        %1171 = vrot.lane.b32.xlu0 %v737, 96
        %v1172 = vpop.permute.xlu0 %1171
        %1173 = vrot.lane.b32.xlu0 %v739, 96
        %v1174 = vpop.permute.xlu0 %1173
        %1175 = vrot.lane.b32.xlu0 %v741, 96
        %v1176 = vpop.permute.xlu0 %1175
        %1177 = vrot.lane.b32.xlu0 %v743, 96
        %v1178 = vpop.permute.xlu0 %1177
        %v1179 = vsel %vm745, %v1156, 0
        %v1181 = vsel %vm745, %v1158, 0
        %v1183 = vsel %vm745, %v1160, 0
        %v1185 = vsel %vm745, %v1162, 0
        %v1187 = vsel %vm745, %v1164, 0
        %v1189 = vsel %vm745, %v1166, 0
        %v1191 = vsel %vm745, %v1168, 0
        %v1193 = vsel %vm745, %v1170, 0
        %v1195 = vsel %vm745, %v1172, 0
        %v1197 = vsel %vm745, %v1174, 0
        %v1199 = vsel %vm745, %v1176, 0
        %v1201 = vsel %vm745, %v1178, 0
        %1203 = vmatprep.subr.mxu0 0.0
        %1204 = vmatpush1.xpose.msra.mxu0 %v1187
        %1205 = vmatprep.subr.mxu0 0.0
        %1206 = vmatpush1.xpose.msra.mxu0 %v1189
        %1207 = vmatprep.subr.mxu0 0.0
        %1208 = vmatpush1.xpose.msra.mxu0 %v1191
        %1209 = vmatprep.subr.mxu0 0.0
        %1210 = vmatpush1.xpose.msra.mxu0 %v1193
        %1211 = vmatprep.subr.mxu0 0.0
        %1212 = vmatpush1.xpose.msra.mxu0 %v1195
        %1213 = vmatprep.subr.mxu0 0.0
        %1214 = vmatpush1.xpose.msra.mxu0 %v1197
        %1215 = vmatprep.subr.mxu0 0.0
        %1216 = vmatpush1.xpose.msra.mxu0 %v1199
        %1217 = vmatprep.subr.mxu0 0.0
        %1218 = vmatpush1.xpose.msra.mxu0 %v1201
        %1219 = vmatprep.subr.mxu0 0.0
        %1220 = vmatpush1.xpose.msra.mxu0 0.0
        %1221 = vmatprep.subr.mxu0 0.0
        %1222 = vmatpush1.xpose.msra.mxu0 0.0
        %1223 = vmatprep.subr.mxu0 0.0
        %1224 = vmatpush1.xpose.msra.mxu0 0.0
        %1225 = vmatprep.subr.mxu0 0.0
        %1226 = vmatpush1.xpose.msra.mxu0 0.0
        %1227 = vmatprep.subr.mxu0 0.0
        %1228 = vmatpush1.xpose.msra.mxu0 0.0
        %1229 = vmatprep.subr.mxu0 0.0
        %1230 = vmatpush1.xpose.msra.mxu0 0.0
        %1231 = vmatprep.subr.mxu0 0.0
        %1232 = vmatpush1.xpose.msra.mxu0 0.0
        %1233 = vmatprep.subr.mxu0 0.0
        %1234 = vmatpush1.xpose.msra.mxu0 0.0
        %1235 = vmatprep.subr.mxu0 0.0
        %1236 = vmatpush1.xpose.msra.mxu0 0.0
        %1237 = vmatprep.subr.mxu0 0.0
        %1238 = vmatpush1.xpose.msra.mxu0 0.0
        %1239 = vmatprep.subr.mxu0 0.0
        %1240 = vmatpush1.xpose.msra.mxu0 0.0
        %1241 = vmatprep.subr.mxu0 0.0
        %1242 = vmatpush1.xpose.msra.mxu0 0.0
        %1243 = vmatprep.subr.mxu0 0.0
        %1244 = vmatpush1.xpose.msra.mxu0 0.0
        %1245 = vmatprep.subr.mxu0 0.0
        %1246 = vmatpush1.xpose.msra.mxu0 0.0
        %1247 = vmatprep.subr.mxu0 0.0
        %1248 = vmatpush1.xpose.msra.mxu0 0.0
        %1249 = vmatprep.subr.mxu0 0.0
        %1250 = vmatpush1.xpose.msra.mxu0 0.0
        %1251 = vmatprep.subr.mxu0 0.0
        %1252 = vmatpush1.xpose.msra.mxu0 0.0
        %1253 = vmatprep.subr.mxu0 0.0
        %1254 = vmatpush1.xpose.msra.mxu0 0.0
        %1255 = vmatprep.subr.mxu0 0.0
        %1256 = vmatpush1.xpose.msra.mxu0 0.0
        %1257 = vmatprep.subr.mxu0 0.0
        %1258 = vmatpush1.xpose.msra.mxu0 0.0
        %1259 = vmatprep.subr.mxu0 0.0
        %1260 = vmatpush1.xpose.msra.mxu0 0.0
        %1261 = vmatprep.subr.mxu0 0.0
        %1262 = vmatpush1.xpose.msra.mxu0 0.0
        %1263 = vmatprep.subr.mxu0 0.0
        %1264 = vmatpush1.xpose.msra.mxu0 0.0
        %1265 = vmatprep.subr.mxu0 0.0
        %1266 = vmatpush1.xpose.msra.mxu0 0.0
        %1267 = vmatprep.mubr.f32.mxu0 0.0
        %1268 = vmatmul.mubr.f32.gmra.mrb[0].mxu0 %v1179
        %v1269 = vpop.f32.mrb[0].mxu0
        %v1270 = vadd.f32 0.0, %v1269
        %v1271 = vpop.f32.mrb[0].mxu0
        %1272 = vmatprep.mubr.f32.mxu0 0.0
        %1273 = vmatmul.mubr.f32.gmra.mrb[0].mxu0 %v1181
        %v1274 = vpop.f32.mrb[0].mxu0
        %v1275 = vadd.f32 0.0, %v1274
        %v1276 = vpop.f32.mrb[0].mxu0
        %1277 = vmatprep.mubr.f32.mxu0 0.0
        %1278 = vmatmul.mubr.f32.gmra.mrb[0].mxu0 %v1183
        %v1279 = vpop.f32.mrb[0].mxu0
        %v1280 = vadd.f32 0.0, %v1279
        %v1281 = vpop.f32.mrb[0].mxu0
        %1282 = vmatprep.mubr.f32.mxu0 0.0
        %1283 = vmatmul.mubr.f32.gmra.mrb[0].mxu0 %v1185
        %v1284 = vpop.f32.mrb[0].mxu0
        %v1285 = vadd.f32 0.0, %v1284
        %v1286 = vpop.f32.mrb[0].mxu0
        %1287 = vdwg.mxu0
        %vm1288 = vcmask 64544
        %v1289 = vsel %vm1288, %v709, -inf
        %1290 = vmax.xlane.f32.xlu0 %v1289
        %v1291 = vpop.xlane.xlu0 %1290
        %v1292 = vsel %vm1288, %v715, -inf
        %1293 = vmax.xlane.f32.xlu0 %v1292
        %v1294 = vpop.xlane.xlu0 %1293
        %v1295 = vsel %vm1288, %v721, -inf
        %1296 = vmax.xlane.f32.xlu0 %v1295
        %v1297 = vpop.xlane.xlu0 %1296
        %v1298 = vsel %vm1288, %v727, -inf
        %1299 = vmax.xlane.f32.xlu0 %v1298
        %v1300 = vpop.xlane.xlu0 %1299
        %v1301 = vsel %vm558, %v1270, -inf
        %1302 = vmax.xlane.f32.xlu0 %v1301
        %v1303 = vpop.xlane.xlu0 %1302
        %v1304 = vsel %vm558, %v1275, -inf
        %1305 = vmax.xlane.f32.xlu0 %v1304
        %v1306 = vpop.xlane.xlu0 %1305
        %v1307 = vsel %vm558, %v1280, -inf
        %1308 = vmax.xlane.f32.xlu0 %v1307
        %v1309 = vpop.xlane.xlu0 %1308
        %v1310 = vsel %vm558, %v1285, -inf
        %1311 = vmax.xlane.f32.xlu0 %v1310
        %v1312 = vpop.xlane.xlu0 %1311
        %v1313 = vmax.f32 %v1291, %v1303
        %v1314 = vmax.f32 %v1294, %v1306
        %v1315 = vmax.f32 %v1297, %v1309
        %v1316 = vmax.f32 %v1300, %v1312
        %v1317 = vsub.f32 %v709, %v1313
        %v1318 = vsub.f32 %v715, %v1314
        %v1319 = vsub.f32 %v721, %v1315
        %v1320 = vsub.f32 %v727, %v1316
        %v1321 = vmul.f32 %v1317, 1.442695
        %v1322 = vpow.pop %v1321
        %v1323 = vmul.f32 %v1318, 1.442695
        %v1324 = vpow.pop %v1323
        %v1325 = vmul.f32 %v1319, 1.442695
        %v1326 = vpow.pop %v1325
        %v1327 = vmul.f32 %v1320, 1.442695
        %v1328 = vpow.pop %v1327
        %v1329 = vsub.f32 %v1270, %v1313
        %v1330 = vsub.f32 %v1275, %v1314
        %v1331 = vsub.f32 %v1280, %v1315
        %v1332 = vsub.f32 %v1285, %v1316
        %v1333 = vmul.f32 %v1329, 1.442695
        %v1334 = vpow.pop %v1333
        %v1335 = vmul.f32 %v1330, 1.442695
        %v1336 = vpow.pop %v1335
        %v1337 = vmul.f32 %v1331, 1.442695
        %v1338 = vpow.pop %v1337
        %v1339 = vmul.f32 %v1332, 1.442695
        %v1340 = vpow.pop %v1339
        %1345 = vrot.lane.b32.xlu0 %v1322, 124
        %v1346 = vpop.permute.xlu0 %1345
        %1347 = vrot.lane.b32.xlu0 %v1324, 124
        %v1348 = vpop.permute.xlu0 %1347
        %1349 = vrot.lane.b32.xlu0 %v1326, 124
        %v1350 = vpop.permute.xlu0 %1349
        %1351 = vrot.lane.b32.xlu0 %v1328, 124
        %v1352 = vpop.permute.xlu0 %1351
        %v1357 = vsel %vm867, %v1346, 0.0
        %1358 = vadd.xlane.f32.xlu0 %v1357
        %v1359 = vpop.xlane.xlu0 %1358
        %v1360 = vsel %vm867, %v1348, 0.0
        %1361 = vadd.xlane.f32.xlu0 %v1360
        %v1362 = vpop.xlane.xlu0 %1361
        %v1363 = vsel %vm867, %v1350, 0.0
        %1364 = vadd.xlane.f32.xlu0 %v1363
        %v1365 = vpop.xlane.xlu0 %1364
        %v1366 = vsel %vm867, %v1352, 0.0
        %1367 = vadd.xlane.f32.xlu0 %v1366
        %v1368 = vpop.xlane.xlu0 %1367
        %v1369 = vsel %vm558, %v1334, 0.0
        %1370 = vadd.xlane.f32.xlu0 %v1369
        %v1371 = vpop.xlane.xlu0 %1370
        %v1372 = vsel %vm558, %v1336, 0.0
        %1373 = vadd.xlane.f32.xlu0 %v1372
        %v1374 = vpop.xlane.xlu0 %1373
        %v1375 = vsel %vm558, %v1338, 0.0
        %1376 = vadd.xlane.f32.xlu0 %v1375
        %v1377 = vpop.xlane.xlu0 %1376
        %v1378 = vsel %vm558, %v1340, 0.0
        %1379 = vadd.xlane.f32.xlu0 %v1378
        %v1380 = vpop.xlane.xlu0 %1379
        %v1381 = vadd.f32 %v1359, %v1371
        %v1382 = vadd.f32 %v1362, %v1374
        %v1383 = vadd.f32 %v1365, %v1377
        %v1384 = vadd.f32 %v1368, %v1380
        %v1385 = vrcp.pop %v1381
        %v1386 = vrcp.pop %v1382
        %v1387 = vrcp.pop %v1383
        %v1388 = vrcp.pop %v1384
        %s1389 = scalar_lea.vmem %s5, 4
        %v1390 = vld [vmem:[%s1389] sm:$0xf]
        %1399 = vrot.lane.b32.xlu0 %v730, 96
        %v1400 = vpop.permute.xlu0 %1399
        %1401 = vrot.lane.b32.xlu0 %v732, 96
        %v1402 = vpop.permute.xlu0 %1401
        %1403 = vrot.lane.b32.xlu0 %v734, 96
        %v1404 = vpop.permute.xlu0 %1403
        %1405 = vrot.lane.b32.xlu0 %v736, 96
        %v1406 = vpop.permute.xlu0 %1405
        %1407 = vrot.lane.b32.xlu0 %v738, 96
        %v1408 = vpop.permute.xlu0 %1407
        %1409 = vrot.lane.b32.xlu0 %v740, 96
        %v1410 = vpop.permute.xlu0 %1409
        %1411 = vrot.lane.b32.xlu0 %v742, 96
        %v1412 = vpop.permute.xlu0 %1411
        %1413 = vrot.lane.b32.xlu0 %v744, 96
        %v1414 = vpop.permute.xlu0 %1413
        %v1424 = vsel %vm558, %v1334, 0
        %v1427 = vsel %vm558, %v1336, 0
        %v1430 = vsel %vm558, %v1338, 0
        %v1433 = vsel %vm558, %v1340, 0
        %1435 = vmatprep.subr.mxu0 0.0
        %1436 = vmatpush1.msra.mxu0 %v1400
        %1437 = vmatprep.subr.mxu0 0.0
        %1438 = vmatpush1.msra.mxu0 %v1402
        %1439 = vmatprep.subr.mxu0 0.0
        %1440 = vmatpush1.msra.mxu0 %v1404
        %1441 = vmatprep.subr.mxu0 0.0
        %1442 = vmatpush1.msra.mxu0 %v1406
        %1443 = vmatprep.subr.mxu0 0.0
        %1444 = vmatpush1.msra.mxu0 %v1408
        %1445 = vmatprep.subr.mxu0 0.0
        %1446 = vmatpush1.msra.mxu0 %v1410
        %1447 = vmatprep.subr.mxu0 0.0
        %1448 = vmatpush1.msra.mxu0 %v1412
        %1449 = vmatprep.subr.mxu0 0.0
        %1450 = vmatpush1.msra.mxu0 %v1414
        %1451 = vmatprep.subr.mxu0 0.0
        %1452 = vmatpush1.msra.mxu0 0.0
        %1453 = vmatprep.subr.mxu0 0.0
        %1454 = vmatpush1.msra.mxu0 0.0
        %1455 = vmatprep.subr.mxu0 0.0
        %1456 = vmatpush1.msra.mxu0 0.0
        %1457 = vmatprep.subr.mxu0 0.0
        %1458 = vmatpush1.msra.mxu0 0.0
        %1459 = vmatprep.subr.mxu0 0.0
        %1460 = vmatpush1.msra.mxu0 0.0
        %1461 = vmatprep.subr.mxu0 0.0
        %1462 = vmatpush1.msra.mxu0 0.0
        %1463 = vmatprep.subr.mxu0 0.0
        %1464 = vmatpush1.msra.mxu0 0.0
        %1465 = vmatprep.subr.mxu0 0.0
        %1466 = vmatpush1.msra.mxu0 0.0
        %1467 = vmatprep.subr.mxu0 0.0
        %1468 = vmatpush1.msra.mxu0 0.0
        %1469 = vmatprep.subr.mxu0 0.0
        %1470 = vmatpush1.msra.mxu0 0.0
        %1471 = vmatprep.subr.mxu0 0.0
        %1472 = vmatpush1.msra.mxu0 0.0
        %1473 = vmatprep.subr.mxu0 0.0
        %1474 = vmatpush1.msra.mxu0 0.0
        %1475 = vmatprep.subr.mxu0 0.0
        %1476 = vmatpush1.msra.mxu0 0.0
        %1477 = vmatprep.subr.mxu0 0.0
        %1478 = vmatpush1.msra.mxu0 0.0
        %1479 = vmatprep.subr.mxu0 0.0
        %1480 = vmatpush1.msra.mxu0 0.0
        %1481 = vmatprep.subr.mxu0 0.0
        %1482 = vmatpush1.msra.mxu0 0.0
        %1483 = vmatprep.subr.mxu0 0.0
        %1484 = vmatpush1.msra.mxu0 0.0
        %1485 = vmatprep.subr.mxu0 0.0
        %1486 = vmatpush1.msra.mxu0 0.0
        %1487 = vmatprep.subr.mxu0 0.0
        %1488 = vmatpush1.msra.mxu0 0.0
        %1489 = vmatprep.subr.mxu0 0.0
        %1490 = vmatpush1.msra.mxu0 0.0
        %1491 = vmatprep.subr.mxu0 0.0
        %1492 = vmatpush1.msra.mxu0 0.0
        %1493 = vmatprep.subr.mxu0 0.0
        %1494 = vmatpush1.msra.mxu0 0.0
        %1495 = vmatprep.subr.mxu0 0.0
        %1496 = vmatpush1.msra.mxu0 0.0
        %1497 = vmatprep.subr.mxu0 0.0
        %1498 = vmatpush1.msra.mxu0 0.0
        %1499 = vmatprep.mubr.f32.mxu0 0.0
        %1500 = vmatmul.mubr.f32.gmra.mrb[0].mxu0 %v1424
        %v1501 = vpop.f32.mrb[0].mxu0
        %v1502 = vadd.f32 0.0, %v1501
        %v1503 = vpop.f32.mrb[0].mxu0
        %1504 = vmatprep.mubr.f32.mxu0 0.0
        %1505 = vmatmul.mubr.f32.gmra.mrb[0].mxu0 %v1427
        %v1506 = vpop.f32.mrb[0].mxu0
        %v1507 = vadd.f32 0.0, %v1506
        %v1508 = vpop.f32.mrb[0].mxu0
        %1509 = vmatprep.mubr.f32.mxu0 0.0
        %1510 = vmatmul.mubr.f32.gmra.mrb[0].mxu0 %v1430
        %v1511 = vpop.f32.mrb[0].mxu0
        %v1512 = vadd.f32 0.0, %v1511
        %v1513 = vpop.f32.mrb[0].mxu0
        %1514 = vmatprep.mubr.f32.mxu0 0.0
        %1515 = vmatmul.mubr.f32.gmra.mrb[0].mxu0 %v1433
        %v1516 = vpop.f32.mrb[0].mxu0
        %v1517 = vadd.f32 0.0, %v1516
        %v1518 = vpop.f32.mrb[0].mxu0
        %1519 = vdwg.mxu0
        %v1520 = vsel %vm867, %v1346, 0
        %v1522 = vsel %vm867, %v1348, 0
        %v1524 = vsel %vm867, %v1350, 0
        %v1526 = vsel %vm867, %v1352, 0
        %v1529 = vsel %vm1062, %v1390, 0
        %1531 = vmatprep.subr.mxu0 0.0
        %1532 = vmatpush1.msra.mxu0 %v1529
        %1533 = vmatprep.subr.mxu0 0.0
        %1534 = vmatpush1.msra.mxu0 0.0
        %1535 = vmatprep.subr.mxu0 0.0
        %1536 = vmatpush1.msra.mxu0 0.0
        %1537 = vmatprep.subr.mxu0 0.0
        %1538 = vmatpush1.msra.mxu0 0.0
        %1539 = vmatprep.subr.mxu0 0.0
        %1540 = vmatpush1.msra.mxu0 0.0
        %1541 = vmatprep.subr.mxu0 0.0
        %1542 = vmatpush1.msra.mxu0 0.0
        %1543 = vmatprep.subr.mxu0 0.0
        %1544 = vmatpush1.msra.mxu0 0.0
        %1545 = vmatprep.subr.mxu0 0.0
        %1546 = vmatpush1.msra.mxu0 0.0
        %1547 = vmatprep.subr.mxu0 0.0
        %1548 = vmatpush1.msra.mxu0 0.0
        %1549 = vmatprep.subr.mxu0 0.0
        %1550 = vmatpush1.msra.mxu0 0.0
        %1551 = vmatprep.subr.mxu0 0.0
        %1552 = vmatpush1.msra.mxu0 0.0
        %1553 = vmatprep.subr.mxu0 0.0
        %1554 = vmatpush1.msra.mxu0 0.0
        %1555 = vmatprep.subr.mxu0 0.0
        %1556 = vmatpush1.msra.mxu0 0.0
        %1557 = vmatprep.subr.mxu0 0.0
        %1558 = vmatpush1.msra.mxu0 0.0
        %1559 = vmatprep.subr.mxu0 0.0
        %1560 = vmatpush1.msra.mxu0 0.0
        %1561 = vmatprep.subr.mxu0 0.0
        %1562 = vmatpush1.msra.mxu0 0.0
        %1563 = vmatprep.subr.mxu0 0.0
        %1564 = vmatpush1.msra.mxu0 0.0
        %1565 = vmatprep.subr.mxu0 0.0
        %1566 = vmatpush1.msra.mxu0 0.0
        %1567 = vmatprep.subr.mxu0 0.0
        %1568 = vmatpush1.msra.mxu0 0.0
        %1569 = vmatprep.subr.mxu0 0.0
        %1570 = vmatpush1.msra.mxu0 0.0
        %1571 = vmatprep.subr.mxu0 0.0
        %1572 = vmatpush1.msra.mxu0 0.0
        %1573 = vmatprep.subr.mxu0 0.0
        %1574 = vmatpush1.msra.mxu0 0.0
        %1575 = vmatprep.subr.mxu0 0.0
        %1576 = vmatpush1.msra.mxu0 0.0
        %1577 = vmatprep.subr.mxu0 0.0
        %1578 = vmatpush1.msra.mxu0 0.0
        %1579 = vmatprep.subr.mxu0 0.0
        %1580 = vmatpush1.msra.mxu0 0.0
        %1581 = vmatprep.subr.mxu0 0.0
        %1582 = vmatpush1.msra.mxu0 0.0
        %1583 = vmatprep.subr.mxu0 0.0
        %1584 = vmatpush1.msra.mxu0 0.0
        %1585 = vmatprep.subr.mxu0 0.0
        %1586 = vmatpush1.msra.mxu0 0.0
        %1587 = vmatprep.subr.mxu0 0.0
        %1588 = vmatpush1.msra.mxu0 0.0
        %1589 = vmatprep.subr.mxu0 0.0
        %1590 = vmatpush1.msra.mxu0 0.0
        %1591 = vmatprep.subr.mxu0 0.0
        %1592 = vmatpush1.msra.mxu0 0.0
        %1593 = vmatprep.subr.mxu0 0.0
        %1594 = vmatpush1.msra.mxu0 0.0
        %1595 = vmatprep.mubr.f32.mxu0 0.0
        %1596 = vmatmul.mubr.f32.gmra.mrb[0].mxu0 %v1520
        %v1597 = vpop.f32.mrb[0].mxu0
        %v1598 = vadd.f32 %v1502, %v1597
        %v1599 = vpop.f32.mrb[0].mxu0
        %1600 = vmatprep.mubr.f32.mxu0 0.0
        %1601 = vmatmul.mubr.f32.gmra.mrb[0].mxu0 %v1522
        %v1602 = vpop.f32.mrb[0].mxu0
        %v1603 = vadd.f32 %v1507, %v1602
        %v1604 = vpop.f32.mrb[0].mxu0
        %1605 = vmatprep.mubr.f32.mxu0 0.0
        %1606 = vmatmul.mubr.f32.gmra.mrb[0].mxu0 %v1524
        %v1607 = vpop.f32.mrb[0].mxu0
        %v1608 = vadd.f32 %v1512, %v1607
        %v1609 = vpop.f32.mrb[0].mxu0
        %1610 = vmatprep.mubr.f32.mxu0 0.0
        %1611 = vmatmul.mubr.f32.gmra.mrb[0].mxu0 %v1526
        %v1612 = vpop.f32.mrb[0].mxu0
        %v1613 = vadd.f32 %v1517, %v1612
        %v1614 = vpop.f32.mrb[0].mxu0
        %1615 = vdwg.mxu0
        %v1616 = vmul.f32 %v1598, %v1385
        %v1617 = vmul.f32 %v1603, %v1386
        %v1618 = vmul.f32 %v1608, %v1387
        %v1619 = vmul.f32 %v1613, %v1388
        %1620 = vrot.lane.b32.xlu0 %v707, 64
        %v1621 = vpop.permute.xlu0 %1620
        %1622 = vrot.lane.b32.xlu0 %v713, 64
        %v1623 = vpop.permute.xlu0 %1622
        %1624 = vrot.lane.b32.xlu0 %v719, 64
        %v1625 = vpop.permute.xlu0 %1624
        %1626 = vrot.lane.b32.xlu0 %v725, 64
        %v1627 = vpop.permute.xlu0 %1626
        %1628 = vrot.lane.b32.xlu0 %v729, 64
        %v1629 = vpop.permute.xlu0 %1628
        %1630 = vrot.lane.b32.xlu0 %v731, 64
        %v1631 = vpop.permute.xlu0 %1630
        %1632 = vrot.lane.b32.xlu0 %v733, 64
        %v1633 = vpop.permute.xlu0 %1632
        %1634 = vrot.lane.b32.xlu0 %v735, 64
        %v1635 = vpop.permute.xlu0 %1634
        %1636 = vrot.lane.b32.xlu0 %v737, 64
        %v1637 = vpop.permute.xlu0 %1636
        %1638 = vrot.lane.b32.xlu0 %v739, 64
        %v1639 = vpop.permute.xlu0 %1638
        %1640 = vrot.lane.b32.xlu0 %v741, 64
        %v1641 = vpop.permute.xlu0 %1640
        %1642 = vrot.lane.b32.xlu0 %v743, 64
        %v1643 = vpop.permute.xlu0 %1642
        %v1644 = vsel %vm745, %v1621, 0
        %v1646 = vsel %vm745, %v1623, 0
        %v1648 = vsel %vm745, %v1625, 0
        %v1650 = vsel %vm745, %v1627, 0
        %v1652 = vsel %vm745, %v1629, 0
        %v1654 = vsel %vm745, %v1631, 0
        %v1656 = vsel %vm745, %v1633, 0
        %v1658 = vsel %vm745, %v1635, 0
        %v1660 = vsel %vm745, %v1637, 0
        %v1662 = vsel %vm745, %v1639, 0
        %v1664 = vsel %vm745, %v1641, 0
        %v1666 = vsel %vm745, %v1643, 0
        %1668 = vmatprep.subr.mxu0 0.0
        %1669 = vmatpush1.xpose.msra.mxu0 %v1652
        %1670 = vmatprep.subr.mxu0 0.0
        %1671 = vmatpush1.xpose.msra.mxu0 %v1654
        %1672 = vmatprep.subr.mxu0 0.0
        %1673 = vmatpush1.xpose.msra.mxu0 %v1656
        %1674 = vmatprep.subr.mxu0 0.0
        %1675 = vmatpush1.xpose.msra.mxu0 %v1658
        %1676 = vmatprep.subr.mxu0 0.0
        %1677 = vmatpush1.xpose.msra.mxu0 %v1660
        %1678 = vmatprep.subr.mxu0 0.0
        %1679 = vmatpush1.xpose.msra.mxu0 %v1662
        %1680 = vmatprep.subr.mxu0 0.0
        %1681 = vmatpush1.xpose.msra.mxu0 %v1664
        %1682 = vmatprep.subr.mxu0 0.0
        %1683 = vmatpush1.xpose.msra.mxu0 %v1666
        %1684 = vmatprep.subr.mxu0 0.0
        %1685 = vmatpush1.xpose.msra.mxu0 0.0
        %1686 = vmatprep.subr.mxu0 0.0
        %1687 = vmatpush1.xpose.msra.mxu0 0.0
        %1688 = vmatprep.subr.mxu0 0.0
        %1689 = vmatpush1.xpose.msra.mxu0 0.0
        %1690 = vmatprep.subr.mxu0 0.0
        %1691 = vmatpush1.xpose.msra.mxu0 0.0
        %1692 = vmatprep.subr.mxu0 0.0
        %1693 = vmatpush1.xpose.msra.mxu0 0.0
        %1694 = vmatprep.subr.mxu0 0.0
        %1695 = vmatpush1.xpose.msra.mxu0 0.0
        %1696 = vmatprep.subr.mxu0 0.0
        %1697 = vmatpush1.xpose.msra.mxu0 0.0
        %1698 = vmatprep.subr.mxu0 0.0
        %1699 = vmatpush1.xpose.msra.mxu0 0.0
        %1700 = vmatprep.subr.mxu0 0.0
        %1701 = vmatpush1.xpose.msra.mxu0 0.0
        %1702 = vmatprep.subr.mxu0 0.0
        %1703 = vmatpush1.xpose.msra.mxu0 0.0
        %1704 = vmatprep.subr.mxu0 0.0
        %1705 = vmatpush1.xpose.msra.mxu0 0.0
        %1706 = vmatprep.subr.mxu0 0.0
        %1707 = vmatpush1.xpose.msra.mxu0 0.0
        %1708 = vmatprep.subr.mxu0 0.0
        %1709 = vmatpush1.xpose.msra.mxu0 0.0
        %1710 = vmatprep.subr.mxu0 0.0
        %1711 = vmatpush1.xpose.msra.mxu0 0.0
        %1712 = vmatprep.subr.mxu0 0.0
        %1713 = vmatpush1.xpose.msra.mxu0 0.0
        %1714 = vmatprep.subr.mxu0 0.0
        %1715 = vmatpush1.xpose.msra.mxu0 0.0
        %1716 = vmatprep.subr.mxu0 0.0
        %1717 = vmatpush1.xpose.msra.mxu0 0.0
        %1718 = vmatprep.subr.mxu0 0.0
        %1719 = vmatpush1.xpose.msra.mxu0 0.0
        %1720 = vmatprep.subr.mxu0 0.0
        %1721 = vmatpush1.xpose.msra.mxu0 0.0
        %1722 = vmatprep.subr.mxu0 0.0
        %1723 = vmatpush1.xpose.msra.mxu0 0.0
        %1724 = vmatprep.subr.mxu0 0.0
        %1725 = vmatpush1.xpose.msra.mxu0 0.0
        %1726 = vmatprep.subr.mxu0 0.0
        %1727 = vmatpush1.xpose.msra.mxu0 0.0
        %1728 = vmatprep.subr.mxu0 0.0
        %1729 = vmatpush1.xpose.msra.mxu0 0.0
        %1730 = vmatprep.subr.mxu0 0.0
        %1731 = vmatpush1.xpose.msra.mxu0 0.0
        %1732 = vmatprep.mubr.f32.mxu0 0.0
        %1733 = vmatmul.mubr.f32.gmra.mrb[0].mxu0 %v1644
        %v1734 = vpop.f32.mrb[0].mxu0
        %v1735 = vadd.f32 0.0, %v1734
        %v1736 = vpop.f32.mrb[0].mxu0
        %1737 = vmatprep.mubr.f32.mxu0 0.0
        %1738 = vmatmul.mubr.f32.gmra.mrb[0].mxu0 %v1646
        %v1739 = vpop.f32.mrb[0].mxu0
        %v1740 = vadd.f32 0.0, %v1739
        %v1741 = vpop.f32.mrb[0].mxu0
        %1742 = vmatprep.mubr.f32.mxu0 0.0
        %1743 = vmatmul.mubr.f32.gmra.mrb[0].mxu0 %v1648
        %v1744 = vpop.f32.mrb[0].mxu0
        %v1745 = vadd.f32 0.0, %v1744
        %v1746 = vpop.f32.mrb[0].mxu0
        %1747 = vmatprep.mubr.f32.mxu0 0.0
        %1748 = vmatmul.mubr.f32.gmra.mrb[0].mxu0 %v1650
        %v1749 = vpop.f32.mrb[0].mxu0
        %v1750 = vadd.f32 0.0, %v1749
        %v1751 = vpop.f32.mrb[0].mxu0
        %1752 = vdwg.mxu0
        %vm1753 = vcmask 97344
        %v1754 = vsel %vm1753, %v709, -inf
        %1755 = vmax.xlane.f32.xlu0 %v1754
        %v1756 = vpop.xlane.xlu0 %1755
        %v1757 = vsel %vm1753, %v715, -inf
        %1758 = vmax.xlane.f32.xlu0 %v1757
        %v1759 = vpop.xlane.xlu0 %1758
        %v1760 = vsel %vm1753, %v721, -inf
        %1761 = vmax.xlane.f32.xlu0 %v1760
        %v1762 = vpop.xlane.xlu0 %1761
        %v1763 = vsel %vm1753, %v727, -inf
        %1764 = vmax.xlane.f32.xlu0 %v1763
        %v1765 = vpop.xlane.xlu0 %1764
        %v1766 = vsel %vm558, %v1735, -inf
        %1767 = vmax.xlane.f32.xlu0 %v1766
        %v1768 = vpop.xlane.xlu0 %1767
        %v1769 = vsel %vm558, %v1740, -inf
        %1770 = vmax.xlane.f32.xlu0 %v1769
        %v1771 = vpop.xlane.xlu0 %1770
        %v1772 = vsel %vm558, %v1745, -inf
        %1773 = vmax.xlane.f32.xlu0 %v1772
        %v1774 = vpop.xlane.xlu0 %1773
        %v1775 = vsel %vm558, %v1750, -inf
        %1776 = vmax.xlane.f32.xlu0 %v1775
        %v1777 = vpop.xlane.xlu0 %1776
        %v1778 = vmax.f32 %v1756, %v1768
        %v1779 = vmax.f32 %v1759, %v1771
        %v1780 = vmax.f32 %v1762, %v1774
        %v1781 = vmax.f32 %v1765, %v1777
        %v1782 = vsub.f32 %v709, %v1778
        %v1783 = vsub.f32 %v715, %v1779
        %v1784 = vsub.f32 %v721, %v1780
        %v1785 = vsub.f32 %v727, %v1781
        %v1786 = vmul.f32 %v1782, 1.442695
        %v1787 = vpow.pop %v1786
        %v1788 = vmul.f32 %v1783, 1.442695
        %v1789 = vpow.pop %v1788
        %v1790 = vmul.f32 %v1784, 1.442695
        %v1791 = vpow.pop %v1790
        %v1792 = vmul.f32 %v1785, 1.442695
        %v1793 = vpow.pop %v1792
        %v1794 = vsub.f32 %v1735, %v1778
        %v1795 = vsub.f32 %v1740, %v1779
        %v1796 = vsub.f32 %v1745, %v1780
        %v1797 = vsub.f32 %v1750, %v1781
        %v1798 = vmul.f32 %v1794, 1.442695
        %v1799 = vpow.pop %v1798
        %v1800 = vmul.f32 %v1795, 1.442695
        %v1801 = vpow.pop %v1800
        %v1802 = vmul.f32 %v1796, 1.442695
        %v1803 = vpow.pop %v1802
        %v1804 = vmul.f32 %v1797, 1.442695
        %v1805 = vpow.pop %v1804
        %1810 = vrot.lane.b32.xlu0 %v1787, 120
        %v1811 = vpop.permute.xlu0 %1810
        %1812 = vrot.lane.b32.xlu0 %v1789, 120
        %v1813 = vpop.permute.xlu0 %1812
        %1814 = vrot.lane.b32.xlu0 %v1791, 120
        %v1815 = vpop.permute.xlu0 %1814
        %1816 = vrot.lane.b32.xlu0 %v1793, 120
        %v1817 = vpop.permute.xlu0 %1816
        %v1822 = vsel %vm867, %v1811, 0.0
        %1823 = vadd.xlane.f32.xlu0 %v1822
        %v1824 = vpop.xlane.xlu0 %1823
        %v1825 = vsel %vm867, %v1813, 0.0
        %1826 = vadd.xlane.f32.xlu0 %v1825
        %v1827 = vpop.xlane.xlu0 %1826
        %v1828 = vsel %vm867, %v1815, 0.0
        %1829 = vadd.xlane.f32.xlu0 %v1828
        %v1830 = vpop.xlane.xlu0 %1829
        %v1831 = vsel %vm867, %v1817, 0.0
        %1832 = vadd.xlane.f32.xlu0 %v1831
        %v1833 = vpop.xlane.xlu0 %1832
        %v1834 = vsel %vm558, %v1799, 0.0
        %1835 = vadd.xlane.f32.xlu0 %v1834
        %v1836 = vpop.xlane.xlu0 %1835
        %v1837 = vsel %vm558, %v1801, 0.0
        %1838 = vadd.xlane.f32.xlu0 %v1837
        %v1839 = vpop.xlane.xlu0 %1838
        %v1840 = vsel %vm558, %v1803, 0.0
        %1841 = vadd.xlane.f32.xlu0 %v1840
        %v1842 = vpop.xlane.xlu0 %1841
        %v1843 = vsel %vm558, %v1805, 0.0
        %1844 = vadd.xlane.f32.xlu0 %v1843
        %v1845 = vpop.xlane.xlu0 %1844
        %v1846 = vadd.f32 %v1824, %v1836
        %v1847 = vadd.f32 %v1827, %v1839
        %v1848 = vadd.f32 %v1830, %v1842
        %v1849 = vadd.f32 %v1833, %v1845
        %v1850 = vrcp.pop %v1846
        %v1851 = vrcp.pop %v1847
        %v1852 = vrcp.pop %v1848
        %v1853 = vrcp.pop %v1849
        %s1854 = scalar_lea.vmem %s5, 8
        %v1855 = vld [vmem:[%s1854] sm:$0xf]
        %1856 = vrot.lane.b32.xlu0 %v730, 64
        %v1857 = vpop.permute.xlu0 %1856
        %1858 = vrot.lane.b32.xlu0 %v732, 64
        %v1859 = vpop.permute.xlu0 %1858
        %1860 = vrot.lane.b32.xlu0 %v734, 64
        %v1861 = vpop.permute.xlu0 %1860
        %1862 = vrot.lane.b32.xlu0 %v736, 64
        %v1863 = vpop.permute.xlu0 %1862
        %1864 = vrot.lane.b32.xlu0 %v738, 64
        %v1865 = vpop.permute.xlu0 %1864
        %1866 = vrot.lane.b32.xlu0 %v740, 64
        %v1867 = vpop.permute.xlu0 %1866
        %1868 = vrot.lane.b32.xlu0 %v742, 64
        %v1869 = vpop.permute.xlu0 %1868
        %1870 = vrot.lane.b32.xlu0 %v744, 64
        %v1871 = vpop.permute.xlu0 %1870
        %v1881 = vsel %vm558, %v1799, 0
        %v1884 = vsel %vm558, %v1801, 0
        %v1887 = vsel %vm558, %v1803, 0
        %v1890 = vsel %vm558, %v1805, 0
        %1892 = vmatprep.subr.mxu0 0.0
        %1893 = vmatpush1.msra.mxu0 %v1857
        %1894 = vmatprep.subr.mxu0 0.0
        %1895 = vmatpush1.msra.mxu0 %v1859
        %1896 = vmatprep.subr.mxu0 0.0
        %1897 = vmatpush1.msra.mxu0 %v1861
        %1898 = vmatprep.subr.mxu0 0.0
        %1899 = vmatpush1.msra.mxu0 %v1863
        %1900 = vmatprep.subr.mxu0 0.0
        %1901 = vmatpush1.msra.mxu0 %v1865
        %1902 = vmatprep.subr.mxu0 0.0
        %1903 = vmatpush1.msra.mxu0 %v1867
        %1904 = vmatprep.subr.mxu0 0.0
        %1905 = vmatpush1.msra.mxu0 %v1869
        %1906 = vmatprep.subr.mxu0 0.0
        %1907 = vmatpush1.msra.mxu0 %v1871
        %1908 = vmatprep.subr.mxu0 0.0
        %1909 = vmatpush1.msra.mxu0 0.0
        %1910 = vmatprep.subr.mxu0 0.0
        %1911 = vmatpush1.msra.mxu0 0.0
        %1912 = vmatprep.subr.mxu0 0.0
        %1913 = vmatpush1.msra.mxu0 0.0
        %1914 = vmatprep.subr.mxu0 0.0
        %1915 = vmatpush1.msra.mxu0 0.0
        %1916 = vmatprep.subr.mxu0 0.0
        %1917 = vmatpush1.msra.mxu0 0.0
        %1918 = vmatprep.subr.mxu0 0.0
        %1919 = vmatpush1.msra.mxu0 0.0
        %1920 = vmatprep.subr.mxu0 0.0
        %1921 = vmatpush1.msra.mxu0 0.0
        %1922 = vmatprep.subr.mxu0 0.0
        %1923 = vmatpush1.msra.mxu0 0.0
        %1924 = vmatprep.subr.mxu0 0.0
        %1925 = vmatpush1.msra.mxu0 0.0
        %1926 = vmatprep.subr.mxu0 0.0
        %1927 = vmatpush1.msra.mxu0 0.0
        %1928 = vmatprep.subr.mxu0 0.0
        %1929 = vmatpush1.msra.mxu0 0.0
        %1930 = vmatprep.subr.mxu0 0.0
        %1931 = vmatpush1.msra.mxu0 0.0
        %1932 = vmatprep.subr.mxu0 0.0
        %1933 = vmatpush1.msra.mxu0 0.0
        %1934 = vmatprep.subr.mxu0 0.0
        %1935 = vmatpush1.msra.mxu0 0.0
        %1936 = vmatprep.subr.mxu0 0.0
        %1937 = vmatpush1.msra.mxu0 0.0
        %1938 = vmatprep.subr.mxu0 0.0
        %1939 = vmatpush1.msra.mxu0 0.0
        %1940 = vmatprep.subr.mxu0 0.0
        %1941 = vmatpush1.msra.mxu0 0.0
        %1942 = vmatprep.subr.mxu0 0.0
        %1943 = vmatpush1.msra.mxu0 0.0
        %1944 = vmatprep.subr.mxu0 0.0
        %1945 = vmatpush1.msra.mxu0 0.0
        %1946 = vmatprep.subr.mxu0 0.0
        %1947 = vmatpush1.msra.mxu0 0.0
        %1948 = vmatprep.subr.mxu0 0.0
        %1949 = vmatpush1.msra.mxu0 0.0
        %1950 = vmatprep.subr.mxu0 0.0
        %1951 = vmatpush1.msra.mxu0 0.0
        %1952 = vmatprep.subr.mxu0 0.0
        %1953 = vmatpush1.msra.mxu0 0.0
        %1954 = vmatprep.subr.mxu0 0.0
        %1955 = vmatpush1.msra.mxu0 0.0
        %1956 = vmatprep.mubr.f32.mxu0 0.0
        %1957 = vmatmul.mubr.f32.gmra.mrb[0].mxu0 %v1881
        %v1958 = vpop.f32.mrb[0].mxu0
        %v1959 = vadd.f32 0.0, %v1958
        %v1960 = vpop.f32.mrb[0].mxu0
        %1961 = vmatprep.mubr.f32.mxu0 0.0
        %1962 = vmatmul.mubr.f32.gmra.mrb[0].mxu0 %v1884
        %v1963 = vpop.f32.mrb[0].mxu0
        %v1964 = vadd.f32 0.0, %v1963
        %v1965 = vpop.f32.mrb[0].mxu0
        %1966 = vmatprep.mubr.f32.mxu0 0.0
        %1967 = vmatmul.mubr.f32.gmra.mrb[0].mxu0 %v1887
        %v1968 = vpop.f32.mrb[0].mxu0
        %v1969 = vadd.f32 0.0, %v1968
        %v1970 = vpop.f32.mrb[0].mxu0
        %1971 = vmatprep.mubr.f32.mxu0 0.0
        %1972 = vmatmul.mubr.f32.gmra.mrb[0].mxu0 %v1890
        %v1973 = vpop.f32.mrb[0].mxu0
        %v1974 = vadd.f32 0.0, %v1973
        %v1975 = vpop.f32.mrb[0].mxu0
        %1976 = vdwg.mxu0
        %v1977 = vsel %vm867, %v1811, 0
        %v1979 = vsel %vm867, %v1813, 0
        %v1981 = vsel %vm867, %v1815, 0
        %v1983 = vsel %vm867, %v1817, 0
        %v1986 = vsel %vm1062, %v1855, 0
        %1988 = vmatprep.subr.mxu0 0.0
        %1989 = vmatpush1.msra.mxu0 %v1986
        %1990 = vmatprep.subr.mxu0 0.0
        %1991 = vmatpush1.msra.mxu0 0.0
        %1992 = vmatprep.subr.mxu0 0.0
        %1993 = vmatpush1.msra.mxu0 0.0
        %1994 = vmatprep.subr.mxu0 0.0
        %1995 = vmatpush1.msra.mxu0 0.0
        %1996 = vmatprep.subr.mxu0 0.0
        %1997 = vmatpush1.msra.mxu0 0.0
        %1998 = vmatprep.subr.mxu0 0.0
        %1999 = vmatpush1.msra.mxu0 0.0
        %2000 = vmatprep.subr.mxu0 0.0
        %2001 = vmatpush1.msra.mxu0 0.0
        %2002 = vmatprep.subr.mxu0 0.0
        %2003 = vmatpush1.msra.mxu0 0.0
        %2004 = vmatprep.subr.mxu0 0.0
        %2005 = vmatpush1.msra.mxu0 0.0
        %2006 = vmatprep.subr.mxu0 0.0
        %2007 = vmatpush1.msra.mxu0 0.0
        %2008 = vmatprep.subr.mxu0 0.0
        %2009 = vmatpush1.msra.mxu0 0.0
        %2010 = vmatprep.subr.mxu0 0.0
        %2011 = vmatpush1.msra.mxu0 0.0
        %2012 = vmatprep.subr.mxu0 0.0
        %2013 = vmatpush1.msra.mxu0 0.0
        %2014 = vmatprep.subr.mxu0 0.0
        %2015 = vmatpush1.msra.mxu0 0.0
        %2016 = vmatprep.subr.mxu0 0.0
        %2017 = vmatpush1.msra.mxu0 0.0
        %2018 = vmatprep.subr.mxu0 0.0
        %2019 = vmatpush1.msra.mxu0 0.0
        %2020 = vmatprep.subr.mxu0 0.0
        %2021 = vmatpush1.msra.mxu0 0.0
        %2022 = vmatprep.subr.mxu0 0.0
        %2023 = vmatpush1.msra.mxu0 0.0
        %2024 = vmatprep.subr.mxu0 0.0
        %2025 = vmatpush1.msra.mxu0 0.0
        %2026 = vmatprep.subr.mxu0 0.0
        %2027 = vmatpush1.msra.mxu0 0.0
        %2028 = vmatprep.subr.mxu0 0.0
        %2029 = vmatpush1.msra.mxu0 0.0
        %2030 = vmatprep.subr.mxu0 0.0
        %2031 = vmatpush1.msra.mxu0 0.0
        %2032 = vmatprep.subr.mxu0 0.0
        %2033 = vmatpush1.msra.mxu0 0.0
        %2034 = vmatprep.subr.mxu0 0.0
        %2035 = vmatpush1.msra.mxu0 0.0
        %2036 = vmatprep.subr.mxu0 0.0
        %2037 = vmatpush1.msra.mxu0 0.0
        %2038 = vmatprep.subr.mxu0 0.0
        %2039 = vmatpush1.msra.mxu0 0.0
        %2040 = vmatprep.subr.mxu0 0.0
        %2041 = vmatpush1.msra.mxu0 0.0
        %2042 = vmatprep.subr.mxu0 0.0
        %2043 = vmatpush1.msra.mxu0 0.0
        %2044 = vmatprep.subr.mxu0 0.0
        %2045 = vmatpush1.msra.mxu0 0.0
        %2046 = vmatprep.subr.mxu0 0.0
        %2047 = vmatpush1.msra.mxu0 0.0
        %2048 = vmatprep.subr.mxu0 0.0
        %2049 = vmatpush1.msra.mxu0 0.0
        %2050 = vmatprep.subr.mxu0 0.0
        %2051 = vmatpush1.msra.mxu0 0.0
        %2052 = vmatprep.mubr.f32.mxu0 0.0
        %2053 = vmatmul.mubr.f32.gmra.mrb[0].mxu0 %v1977
        %v2054 = vpop.f32.mrb[0].mxu0
        %v2055 = vadd.f32 %v1959, %v2054
        %v2056 = vpop.f32.mrb[0].mxu0
        %2057 = vmatprep.mubr.f32.mxu0 0.0
        %2058 = vmatmul.mubr.f32.gmra.mrb[0].mxu0 %v1979
        %v2059 = vpop.f32.mrb[0].mxu0
        %v2060 = vadd.f32 %v1964, %v2059
        %v2061 = vpop.f32.mrb[0].mxu0
        %2062 = vmatprep.mubr.f32.mxu0 0.0
        %2063 = vmatmul.mubr.f32.gmra.mrb[0].mxu0 %v1981
        %v2064 = vpop.f32.mrb[0].mxu0
        %v2065 = vadd.f32 %v1969, %v2064
        %v2066 = vpop.f32.mrb[0].mxu0
        %2067 = vmatprep.mubr.f32.mxu0 0.0
        %2068 = vmatmul.mubr.f32.gmra.mrb[0].mxu0 %v1983
        %v2069 = vpop.f32.mrb[0].mxu0
        %v2070 = vadd.f32 %v1974, %v2069
        %v2071 = vpop.f32.mrb[0].mxu0
        %2072 = vdwg.mxu0
        %v2073 = vmul.f32 %v2055, %v1850
        %v2074 = vmul.f32 %v2060, %v1851
        %v2075 = vmul.f32 %v2065, %v1852
        %v2076 = vmul.f32 %v2070, %v1853
        %2077 = vrot.lane.b32.xlu0 %v707, 32
        %v2078 = vpop.permute.xlu0 %2077
        %2079 = vrot.lane.b32.xlu0 %v713, 32
        %v2080 = vpop.permute.xlu0 %2079
        %2081 = vrot.lane.b32.xlu0 %v719, 32
        %v2082 = vpop.permute.xlu0 %2081
        %2083 = vrot.lane.b32.xlu0 %v725, 32
        %v2084 = vpop.permute.xlu0 %2083
        %2085 = vrot.lane.b32.xlu0 %v729, 32
        %v2086 = vpop.permute.xlu0 %2085
        %2087 = vrot.lane.b32.xlu0 %v731, 32
        %v2088 = vpop.permute.xlu0 %2087
        %2089 = vrot.lane.b32.xlu0 %v733, 32
        %v2090 = vpop.permute.xlu0 %2089
        %2091 = vrot.lane.b32.xlu0 %v735, 32
        %v2092 = vpop.permute.xlu0 %2091
        %2093 = vrot.lane.b32.xlu0 %v737, 32
        %v2094 = vpop.permute.xlu0 %2093
        %2095 = vrot.lane.b32.xlu0 %v739, 32
        %v2096 = vpop.permute.xlu0 %2095
        %2097 = vrot.lane.b32.xlu0 %v741, 32
        %v2098 = vpop.permute.xlu0 %2097
        %2099 = vrot.lane.b32.xlu0 %v743, 32
        %v2100 = vpop.permute.xlu0 %2099
        %v2101 = vsel %vm745, %v2078, 0
        %v2103 = vsel %vm745, %v2080, 0
        %v2105 = vsel %vm745, %v2082, 0
        %v2107 = vsel %vm745, %v2084, 0
        %v2109 = vsel %vm745, %v2086, 0
        %v2111 = vsel %vm745, %v2088, 0
        %v2113 = vsel %vm745, %v2090, 0
        %v2115 = vsel %vm745, %v2092, 0
        %v2117 = vsel %vm745, %v2094, 0
        %v2119 = vsel %vm745, %v2096, 0
        %v2121 = vsel %vm745, %v2098, 0
        %v2123 = vsel %vm745, %v2100, 0
        %2125 = vmatprep.subr.mxu0 0.0
        %2126 = vmatpush1.xpose.msra.mxu0 %v2109
        %2127 = vmatprep.subr.mxu0 0.0
        %2128 = vmatpush1.xpose.msra.mxu0 %v2111
        %2129 = vmatprep.subr.mxu0 0.0
        %2130 = vmatpush1.xpose.msra.mxu0 %v2113
        %2131 = vmatprep.subr.mxu0 0.0
        %2132 = vmatpush1.xpose.msra.mxu0 %v2115
        %2133 = vmatprep.subr.mxu0 0.0
        %2134 = vmatpush1.xpose.msra.mxu0 %v2117
        %2135 = vmatprep.subr.mxu0 0.0
        %2136 = vmatpush1.xpose.msra.mxu0 %v2119
        %2137 = vmatprep.subr.mxu0 0.0
        %2138 = vmatpush1.xpose.msra.mxu0 %v2121
        %2139 = vmatprep.subr.mxu0 0.0
        %2140 = vmatpush1.xpose.msra.mxu0 %v2123
        %2141 = vmatprep.subr.mxu0 0.0
        %2142 = vmatpush1.xpose.msra.mxu0 0.0
        %2143 = vmatprep.subr.mxu0 0.0
        %2144 = vmatpush1.xpose.msra.mxu0 0.0
        %2145 = vmatprep.subr.mxu0 0.0
        %2146 = vmatpush1.xpose.msra.mxu0 0.0
        %2147 = vmatprep.subr.mxu0 0.0
        %2148 = vmatpush1.xpose.msra.mxu0 0.0
        %2149 = vmatprep.subr.mxu0 0.0
        %2150 = vmatpush1.xpose.msra.mxu0 0.0
        %2151 = vmatprep.subr.mxu0 0.0
        %2152 = vmatpush1.xpose.msra.mxu0 0.0
        %2153 = vmatprep.subr.mxu0 0.0
        %2154 = vmatpush1.xpose.msra.mxu0 0.0
        %2155 = vmatprep.subr.mxu0 0.0
        %2156 = vmatpush1.xpose.msra.mxu0 0.0
        %2157 = vmatprep.subr.mxu0 0.0
        %2158 = vmatpush1.xpose.msra.mxu0 0.0
        %2159 = vmatprep.subr.mxu0 0.0
        %2160 = vmatpush1.xpose.msra.mxu0 0.0
        %2161 = vmatprep.subr.mxu0 0.0
        %2162 = vmatpush1.xpose.msra.mxu0 0.0
        %2163 = vmatprep.subr.mxu0 0.0
        %2164 = vmatpush1.xpose.msra.mxu0 0.0
        %2165 = vmatprep.subr.mxu0 0.0
        %2166 = vmatpush1.xpose.msra.mxu0 0.0
        %2167 = vmatprep.subr.mxu0 0.0
        %2168 = vmatpush1.xpose.msra.mxu0 0.0
        %2169 = vmatprep.subr.mxu0 0.0
        %2170 = vmatpush1.xpose.msra.mxu0 0.0
        %2171 = vmatprep.subr.mxu0 0.0
        %2172 = vmatpush1.xpose.msra.mxu0 0.0
        %2173 = vmatprep.subr.mxu0 0.0
        %2174 = vmatpush1.xpose.msra.mxu0 0.0
        %2175 = vmatprep.subr.mxu0 0.0
        %2176 = vmatpush1.xpose.msra.mxu0 0.0
        %2177 = vmatprep.subr.mxu0 0.0
        %2178 = vmatpush1.xpose.msra.mxu0 0.0
        %2179 = vmatprep.subr.mxu0 0.0
        %2180 = vmatpush1.xpose.msra.mxu0 0.0
        %2181 = vmatprep.subr.mxu0 0.0
        %2182 = vmatpush1.xpose.msra.mxu0 0.0
        %2183 = vmatprep.subr.mxu0 0.0
        %2184 = vmatpush1.xpose.msra.mxu0 0.0
        %2185 = vmatprep.subr.mxu0 0.0
        %2186 = vmatpush1.xpose.msra.mxu0 0.0
        %2187 = vmatprep.subr.mxu0 0.0
        %2188 = vmatpush1.xpose.msra.mxu0 0.0
        %2189 = vmatprep.mubr.f32.mxu0 0.0
        %2190 = vmatmul.mubr.f32.gmra.mrb[0].mxu0 %v2101
        %v2191 = vpop.f32.mrb[0].mxu0
        %v2192 = vadd.f32 0.0, %v2191
        %v2193 = vpop.f32.mrb[0].mxu0
        %2194 = vmatprep.mubr.f32.mxu0 0.0
        %2195 = vmatmul.mubr.f32.gmra.mrb[0].mxu0 %v2103
        %v2196 = vpop.f32.mrb[0].mxu0
        %v2197 = vadd.f32 0.0, %v2196
        %v2198 = vpop.f32.mrb[0].mxu0
        %2199 = vmatprep.mubr.f32.mxu0 0.0
        %2200 = vmatmul.mubr.f32.gmra.mrb[0].mxu0 %v2105
        %v2201 = vpop.f32.mrb[0].mxu0
        %v2202 = vadd.f32 0.0, %v2201
        %v2203 = vpop.f32.mrb[0].mxu0
        %2204 = vmatprep.mubr.f32.mxu0 0.0
        %2205 = vmatmul.mubr.f32.gmra.mrb[0].mxu0 %v2107
        %v2206 = vpop.f32.mrb[0].mxu0
        %v2207 = vadd.f32 0.0, %v2206
        %v2208 = vpop.f32.mrb[0].mxu0
        %2209 = vdwg.mxu0
        %vm2210 = vcmask 130144
        %v2211 = vsel %vm2210, %v709, -inf
        %2212 = vmax.xlane.f32.xlu0 %v2211
        %v2213 = vpop.xlane.xlu0 %2212
        %v2214 = vsel %vm2210, %v715, -inf
        %2215 = vmax.xlane.f32.xlu0 %v2214
        %v2216 = vpop.xlane.xlu0 %2215
        %v2217 = vsel %vm2210, %v721, -inf
        %2218 = vmax.xlane.f32.xlu0 %v2217
        %v2219 = vpop.xlane.xlu0 %2218
        %v2220 = vsel %vm2210, %v727, -inf
        %2221 = vmax.xlane.f32.xlu0 %v2220
        %v2222 = vpop.xlane.xlu0 %2221
        %v2223 = vsel %vm558, %v2192, -inf
        %2224 = vmax.xlane.f32.xlu0 %v2223
        %v2225 = vpop.xlane.xlu0 %2224
        %v2226 = vsel %vm558, %v2197, -inf
        %2227 = vmax.xlane.f32.xlu0 %v2226
        %v2228 = vpop.xlane.xlu0 %2227
        %v2229 = vsel %vm558, %v2202, -inf
        %2230 = vmax.xlane.f32.xlu0 %v2229
        %v2231 = vpop.xlane.xlu0 %2230
        %v2232 = vsel %vm558, %v2207, -inf
        %2233 = vmax.xlane.f32.xlu0 %v2232
        %v2234 = vpop.xlane.xlu0 %2233
        %v2235 = vmax.f32 %v2213, %v2225
        %v2236 = vmax.f32 %v2216, %v2228
        %v2237 = vmax.f32 %v2219, %v2231
        %v2238 = vmax.f32 %v2222, %v2234
        %v2239 = vsub.f32 %v709, %v2235
        %v2240 = vsub.f32 %v715, %v2236
        %v2241 = vsub.f32 %v721, %v2237
        %v2242 = vsub.f32 %v727, %v2238
        %v2243 = vmul.f32 %v2239, 1.442695
        %v2244 = vpow.pop %v2243
        %v2245 = vmul.f32 %v2240, 1.442695
        %v2246 = vpow.pop %v2245
        %v2247 = vmul.f32 %v2241, 1.442695
        %v2248 = vpow.pop %v2247
        %v2249 = vmul.f32 %v2242, 1.442695
        %v2250 = vpow.pop %v2249
        %v2251 = vsub.f32 %v2192, %v2235
        %v2252 = vsub.f32 %v2197, %v2236
        %v2253 = vsub.f32 %v2202, %v2237
        %v2254 = vsub.f32 %v2207, %v2238
        %v2255 = vmul.f32 %v2251, 1.442695
        %v2256 = vpow.pop %v2255
        %v2257 = vmul.f32 %v2252, 1.442695
        %v2258 = vpow.pop %v2257
        %v2259 = vmul.f32 %v2253, 1.442695
        %v2260 = vpow.pop %v2259
        %v2261 = vmul.f32 %v2254, 1.442695
        %v2262 = vpow.pop %v2261
        %2267 = vrot.lane.b32.xlu0 %v2244, 116
        %v2268 = vpop.permute.xlu0 %2267
        %2269 = vrot.lane.b32.xlu0 %v2246, 116
        %v2270 = vpop.permute.xlu0 %2269
        %2271 = vrot.lane.b32.xlu0 %v2248, 116
        %v2272 = vpop.permute.xlu0 %2271
        %2273 = vrot.lane.b32.xlu0 %v2250, 116
        %v2274 = vpop.permute.xlu0 %2273
        %v2279 = vsel %vm867, %v2268, 0.0
        %2280 = vadd.xlane.f32.xlu0 %v2279
        %v2281 = vpop.xlane.xlu0 %2280
        %v2282 = vsel %vm867, %v2270, 0.0
        %2283 = vadd.xlane.f32.xlu0 %v2282
        %v2284 = vpop.xlane.xlu0 %2283
        %v2285 = vsel %vm867, %v2272, 0.0
        %2286 = vadd.xlane.f32.xlu0 %v2285
        %v2287 = vpop.xlane.xlu0 %2286
        %v2288 = vsel %vm867, %v2274, 0.0
        %2289 = vadd.xlane.f32.xlu0 %v2288
        %v2290 = vpop.xlane.xlu0 %2289
        %v2291 = vsel %vm558, %v2256, 0.0
        %2292 = vadd.xlane.f32.xlu0 %v2291
        %v2293 = vpop.xlane.xlu0 %2292
        %v2294 = vsel %vm558, %v2258, 0.0
        %2295 = vadd.xlane.f32.xlu0 %v2294
        %v2296 = vpop.xlane.xlu0 %2295
        %v2297 = vsel %vm558, %v2260, 0.0
        %2298 = vadd.xlane.f32.xlu0 %v2297
        %v2299 = vpop.xlane.xlu0 %2298
        %v2300 = vsel %vm558, %v2262, 0.0
        %2301 = vadd.xlane.f32.xlu0 %v2300
        %v2302 = vpop.xlane.xlu0 %2301
        %v2303 = vadd.f32 %v2281, %v2293
        %v2304 = vadd.f32 %v2284, %v2296
        %v2305 = vadd.f32 %v2287, %v2299
        %v2306 = vadd.f32 %v2290, %v2302
        %v2307 = vrcp.pop %v2303
        %v2308 = vrcp.pop %v2304
        %v2309 = vrcp.pop %v2305
        %v2310 = vrcp.pop %v2306
        %s2311 = scalar_lea.vmem %s5, 12
        %v2312 = vld [vmem:[%s2311] sm:$0xf]
        %2313 = vrot.lane.b32.xlu0 %v730, 32
        %v2314 = vpop.permute.xlu0 %2313
        %2315 = vrot.lane.b32.xlu0 %v732, 32
        %v2316 = vpop.permute.xlu0 %2315
        %2317 = vrot.lane.b32.xlu0 %v734, 32
        %v2318 = vpop.permute.xlu0 %2317
        %2319 = vrot.lane.b32.xlu0 %v736, 32
        %v2320 = vpop.permute.xlu0 %2319
        %2321 = vrot.lane.b32.xlu0 %v738, 32
        %v2322 = vpop.permute.xlu0 %2321
        %2323 = vrot.lane.b32.xlu0 %v740, 32
        %v2324 = vpop.permute.xlu0 %2323
        %2325 = vrot.lane.b32.xlu0 %v742, 32
        %v2326 = vpop.permute.xlu0 %2325
        %2327 = vrot.lane.b32.xlu0 %v744, 32
        %v2328 = vpop.permute.xlu0 %2327
        %v2338 = vsel %vm558, %v2256, 0
        %v2341 = vsel %vm558, %v2258, 0
        %v2344 = vsel %vm558, %v2260, 0
        %v2347 = vsel %vm558, %v2262, 0
        %2349 = vmatprep.subr.mxu0 0.0
        %2350 = vmatpush1.msra.mxu0 %v2314
        %2351 = vmatprep.subr.mxu0 0.0
        %2352 = vmatpush1.msra.mxu0 %v2316
        %2353 = vmatprep.subr.mxu0 0.0
        %2354 = vmatpush1.msra.mxu0 %v2318
        %2355 = vmatprep.subr.mxu0 0.0
        %2356 = vmatpush1.msra.mxu0 %v2320
        %2357 = vmatprep.subr.mxu0 0.0
        %2358 = vmatpush1.msra.mxu0 %v2322
        %2359 = vmatprep.subr.mxu0 0.0
        %2360 = vmatpush1.msra.mxu0 %v2324
        %2361 = vmatprep.subr.mxu0 0.0
        %2362 = vmatpush1.msra.mxu0 %v2326
        %2363 = vmatprep.subr.mxu0 0.0
        %2364 = vmatpush1.msra.mxu0 %v2328
        %2365 = vmatprep.subr.mxu0 0.0
        %2366 = vmatpush1.msra.mxu0 0.0
        %2367 = vmatprep.subr.mxu0 0.0
        %2368 = vmatpush1.msra.mxu0 0.0
        %2369 = vmatprep.subr.mxu0 0.0
        %2370 = vmatpush1.msra.mxu0 0.0
        %2371 = vmatprep.subr.mxu0 0.0
        %2372 = vmatpush1.msra.mxu0 0.0
        %2373 = vmatprep.subr.mxu0 0.0
        %2374 = vmatpush1.msra.mxu0 0.0
        %2375 = vmatprep.subr.mxu0 0.0
        %2376 = vmatpush1.msra.mxu0 0.0
        %2377 = vmatprep.subr.mxu0 0.0
        %2378 = vmatpush1.msra.mxu0 0.0
        %2379 = vmatprep.subr.mxu0 0.0
        %2380 = vmatpush1.msra.mxu0 0.0
        %2381 = vmatprep.subr.mxu0 0.0
        %2382 = vmatpush1.msra.mxu0 0.0
        %2383 = vmatprep.subr.mxu0 0.0
        %2384 = vmatpush1.msra.mxu0 0.0
        %2385 = vmatprep.subr.mxu0 0.0
        %2386 = vmatpush1.msra.mxu0 0.0
        %2387 = vmatprep.subr.mxu0 0.0
        %2388 = vmatpush1.msra.mxu0 0.0
        %2389 = vmatprep.subr.mxu0 0.0
        %2390 = vmatpush1.msra.mxu0 0.0
        %2391 = vmatprep.subr.mxu0 0.0
        %2392 = vmatpush1.msra.mxu0 0.0
        %2393 = vmatprep.subr.mxu0 0.0
        %2394 = vmatpush1.msra.mxu0 0.0
        %2395 = vmatprep.subr.mxu0 0.0
        %2396 = vmatpush1.msra.mxu0 0.0
        %2397 = vmatprep.subr.mxu0 0.0
        %2398 = vmatpush1.msra.mxu0 0.0
        %2399 = vmatprep.subr.mxu0 0.0
        %2400 = vmatpush1.msra.mxu0 0.0
        %2401 = vmatprep.subr.mxu0 0.0
        %2402 = vmatpush1.msra.mxu0 0.0
        %2403 = vmatprep.subr.mxu0 0.0
        %2404 = vmatpush1.msra.mxu0 0.0
        %2405 = vmatprep.subr.mxu0 0.0
        %2406 = vmatpush1.msra.mxu0 0.0
        %2407 = vmatprep.subr.mxu0 0.0
        %2408 = vmatpush1.msra.mxu0 0.0
        %2409 = vmatprep.subr.mxu0 0.0
        %2410 = vmatpush1.msra.mxu0 0.0
        %2411 = vmatprep.subr.mxu0 0.0
        %2412 = vmatpush1.msra.mxu0 0.0
        %2413 = vmatprep.mubr.f32.mxu0 0.0
        %2414 = vmatmul.mubr.f32.gmra.mrb[0].mxu0 %v2338
        %v2415 = vpop.f32.mrb[0].mxu0
        %v2416 = vadd.f32 0.0, %v2415
        %v2417 = vpop.f32.mrb[0].mxu0
        %2418 = vmatprep.mubr.f32.mxu0 0.0
        %2419 = vmatmul.mubr.f32.gmra.mrb[0].mxu0 %v2341
        %v2420 = vpop.f32.mrb[0].mxu0
        %v2421 = vadd.f32 0.0, %v2420
        %v2422 = vpop.f32.mrb[0].mxu0
        %2423 = vmatprep.mubr.f32.mxu0 0.0
        %2424 = vmatmul.mubr.f32.gmra.mrb[0].mxu0 %v2344
        %v2425 = vpop.f32.mrb[0].mxu0
        %v2426 = vadd.f32 0.0, %v2425
        %v2427 = vpop.f32.mrb[0].mxu0
        %2428 = vmatprep.mubr.f32.mxu0 0.0
        %2429 = vmatmul.mubr.f32.gmra.mrb[0].mxu0 %v2347
        %v2430 = vpop.f32.mrb[0].mxu0
        %v2431 = vadd.f32 0.0, %v2430
        %v2432 = vpop.f32.mrb[0].mxu0
        %2433 = vdwg.mxu0
        %v2434 = vsel %vm867, %v2268, 0
        %v2436 = vsel %vm867, %v2270, 0
        %v2438 = vsel %vm867, %v2272, 0
        %v2440 = vsel %vm867, %v2274, 0
        %v2443 = vsel %vm1062, %v2312, 0
        %2445 = vmatprep.subr.mxu0 0.0
        %2446 = vmatpush1.msra.mxu0 %v2443
        %2447 = vmatprep.subr.mxu0 0.0
        %2448 = vmatpush1.msra.mxu0 0.0
        %2449 = vmatprep.subr.mxu0 0.0
        %2450 = vmatpush1.msra.mxu0 0.0
        %2451 = vmatprep.subr.mxu0 0.0
        %2452 = vmatpush1.msra.mxu0 0.0
        %2453 = vmatprep.subr.mxu0 0.0
        %2454 = vmatpush1.msra.mxu0 0.0
        %2455 = vmatprep.subr.mxu0 0.0
        %2456 = vmatpush1.msra.mxu0 0.0
        %2457 = vmatprep.subr.mxu0 0.0
        %2458 = vmatpush1.msra.mxu0 0.0
        %2459 = vmatprep.subr.mxu0 0.0
        %2460 = vmatpush1.msra.mxu0 0.0
        %2461 = vmatprep.subr.mxu0 0.0
        %2462 = vmatpush1.msra.mxu0 0.0
        %2463 = vmatprep.subr.mxu0 0.0
        %2464 = vmatpush1.msra.mxu0 0.0
        %2465 = vmatprep.subr.mxu0 0.0
        %2466 = vmatpush1.msra.mxu0 0.0
        %2467 = vmatprep.subr.mxu0 0.0
        %2468 = vmatpush1.msra.mxu0 0.0
        %2469 = vmatprep.subr.mxu0 0.0
        %2470 = vmatpush1.msra.mxu0 0.0
        %2471 = vmatprep.subr.mxu0 0.0
        %2472 = vmatpush1.msra.mxu0 0.0
        %2473 = vmatprep.subr.mxu0 0.0
        %2474 = vmatpush1.msra.mxu0 0.0
        %2475 = vmatprep.subr.mxu0 0.0
        %2476 = vmatpush1.msra.mxu0 0.0
        %2477 = vmatprep.subr.mxu0 0.0
        %2478 = vmatpush1.msra.mxu0 0.0
        %2479 = vmatprep.subr.mxu0 0.0
        %2480 = vmatpush1.msra.mxu0 0.0
        %2481 = vmatprep.subr.mxu0 0.0
        %2482 = vmatpush1.msra.mxu0 0.0
        %2483 = vmatprep.subr.mxu0 0.0
        %2484 = vmatpush1.msra.mxu0 0.0
        %2485 = vmatprep.subr.mxu0 0.0
        %2486 = vmatpush1.msra.mxu0 0.0
        %2487 = vmatprep.subr.mxu0 0.0
        %2488 = vmatpush1.msra.mxu0 0.0
        %2489 = vmatprep.subr.mxu0 0.0
        %2490 = vmatpush1.msra.mxu0 0.0
        %2491 = vmatprep.subr.mxu0 0.0
        %2492 = vmatpush1.msra.mxu0 0.0
        %2493 = vmatprep.subr.mxu0 0.0
        %2494 = vmatpush1.msra.mxu0 0.0
        %2495 = vmatprep.subr.mxu0 0.0
        %2496 = vmatpush1.msra.mxu0 0.0
        %2497 = vmatprep.subr.mxu0 0.0
        %2498 = vmatpush1.msra.mxu0 0.0
        %2499 = vmatprep.subr.mxu0 0.0
        %2500 = vmatpush1.msra.mxu0 0.0
        %2501 = vmatprep.subr.mxu0 0.0
        %2502 = vmatpush1.msra.mxu0 0.0
        %2503 = vmatprep.subr.mxu0 0.0
        %2504 = vmatpush1.msra.mxu0 0.0
        %2505 = vmatprep.subr.mxu0 0.0
        %2506 = vmatpush1.msra.mxu0 0.0
        %2507 = vmatprep.subr.mxu0 0.0
        %2508 = vmatpush1.msra.mxu0 0.0
        %2509 = vmatprep.mubr.f32.mxu0 0.0
        %2510 = vmatmul.mubr.f32.gmra.mrb[0].mxu0 %v2434
        %v2511 = vpop.f32.mrb[0].mxu0
        %v2512 = vadd.f32 %v2416, %v2511
        %v2513 = vpop.f32.mrb[0].mxu0
        %2514 = vmatprep.mubr.f32.mxu0 0.0
        %2515 = vmatmul.mubr.f32.gmra.mrb[0].mxu0 %v2436
        %v2516 = vpop.f32.mrb[0].mxu0
        %v2517 = vadd.f32 %v2421, %v2516
        %v2518 = vpop.f32.mrb[0].mxu0
        %2519 = vmatprep.mubr.f32.mxu0 0.0
        %2520 = vmatmul.mubr.f32.gmra.mrb[0].mxu0 %v2438
        %v2521 = vpop.f32.mrb[0].mxu0
        %v2522 = vadd.f32 %v2426, %v2521
        %v2523 = vpop.f32.mrb[0].mxu0
        %2524 = vmatprep.mubr.f32.mxu0 0.0
        %2525 = vmatmul.mubr.f32.gmra.mrb[0].mxu0 %v2440
        %v2526 = vpop.f32.mrb[0].mxu0
        %v2527 = vadd.f32 %v2431, %v2526
        %v2528 = vpop.f32.mrb[0].mxu0
        %2529 = vdwg.mxu0
        %v2530 = vmul.f32 %v2512, %v2307
        %v2531 = vmul.f32 %v2517, %v2308
        %v2532 = vmul.f32 %v2522, %v2309
        %v2533 = vmul.f32 %v2527, %v2310
        %2538 = vrot.lane.b32.xlu0 %v1616, 32
        %v2539 = vpop.permute.xlu0 %2538
        %2540 = vrot.lane.b32.xlu0 %v1617, 32
        %v2541 = vpop.permute.xlu0 %2540
        %2542 = vrot.lane.b32.xlu0 %v1618, 32
        %v2543 = vpop.permute.xlu0 %2542
        %2544 = vrot.lane.b32.xlu0 %v1619, 32
        %v2545 = vpop.permute.xlu0 %2544
        %2554 = vrot.lane.b32.xlu0 %v2073, 64
        %v2555 = vpop.permute.xlu0 %2554
        %2556 = vrot.lane.b32.xlu0 %v2074, 64
        %v2557 = vpop.permute.xlu0 %2556
        %2558 = vrot.lane.b32.xlu0 %v2075, 64
        %v2559 = vpop.permute.xlu0 %2558
        %2560 = vrot.lane.b32.xlu0 %v2076, 64
        %v2561 = vpop.permute.xlu0 %2560
        %2570 = vrot.lane.b32.xlu0 %v2530, 96
        %v2571 = vpop.permute.xlu0 %2570
        %2572 = vrot.lane.b32.xlu0 %v2531, 96
        %v2573 = vpop.permute.xlu0 %2572
        %2574 = vrot.lane.b32.xlu0 %v2532, 96
        %v2575 = vpop.permute.xlu0 %2574
        %2576 = vrot.lane.b32.xlu0 %v2533, 96
        %v2577 = vpop.permute.xlu0 %2576
        %v2582 = vsel %vm745, %v1151, %v2539
        %v2583 = vsel %vm745, %v1152, %v2541
        %v2584 = vsel %vm745, %v1153, %v2543
        %v2585 = vsel %vm745, %v1154, %v2545
        %v2586 = vsel %vm558, %v2582, %v2555
        %v2587 = vsel %vm558, %v2583, %v2557
        %v2588 = vsel %vm558, %v2584, %v2559
        %v2589 = vsel %vm558, %v2585, %v2561
        %vm2590 = vcmask 785408
        %v2591 = vsel %vm2590, %v2586, %v2571
        %v2592 = vsel %vm2590, %v2587, %v2573
        %v2593 = vsel %vm2590, %v2588, %v2575
        %v2594 = vsel %vm2590, %v2589, %v2577
        %v2595 = vld [vmem:[%s3] sm:$0xff]
        %v2596 = vld [vmem:[%s3 + $0x8] sm:$0xff]
        %v2597 = vld [vmem:[%s3 + $0x10] sm:$0xff]
        %v2598 = vld [vmem:[%s3 + $0x18] sm:$0xff]
        %v2599 = vld [vmem:[%s3 + $0x20] sm:$0xff]
        %v2600 = vld [vmem:[%s3 + $0x28] sm:$0xff]
        %v2601 = vld [vmem:[%s3 + $0x30] sm:$0xff]
        %v2602 = vld [vmem:[%s3 + $0x38] sm:$0xff]
        %v2603 = vld [vmem:[%s3 + $0x40] sm:$0xff]
        %v2604 = vld [vmem:[%s3 + $0x48] sm:$0xff]
        %v2605 = vld [vmem:[%s3 + $0x50] sm:$0xff]
        %v2606 = vld [vmem:[%s3 + $0x58] sm:$0xff]
        %v2607 = vld [vmem:[%s3 + $0x60] sm:$0xff]
        %v2608 = vld [vmem:[%s3 + $0x68] sm:$0xff]
        %v2609 = vld [vmem:[%s3 + $0x70] sm:$0xff]
        %v2610 = vld [vmem:[%s3 + $0x78] sm:$0xff]
        %v2611 = vld [vmem:[%s4] sm:$0x1]
        %v2613 = vlaneseq
        %v2614 = vshrl.u32 %v2613, 7
        %v2615 = vsub.s32 0, %v2614
        %v2616 = vrot.slane %v2611, %v2615
        %2618 = vmatprep.subr.mxu0 0.0
        %2619 = vmatpush1.msra.mxu0 %v2595
        %2620 = vmatprep.subr.mxu0 0.0
        %2621 = vmatpush1.msra.mxu0 %v2596
        %2622 = vmatprep.subr.mxu0 0.0
        %2623 = vmatpush1.msra.mxu0 %v2597
        %2624 = vmatprep.subr.mxu0 0.0
        %2625 = vmatpush1.msra.mxu0 %v2598
        %2626 = vmatprep.subr.mxu0 0.0
        %2627 = vmatpush1.msra.mxu0 %v2599
        %2628 = vmatprep.subr.mxu0 0.0
        %2629 = vmatpush1.msra.mxu0 %v2600
        %2630 = vmatprep.subr.mxu0 0.0
        %2631 = vmatpush1.msra.mxu0 %v2601
        %2632 = vmatprep.subr.mxu0 0.0
        %2633 = vmatpush1.msra.mxu0 %v2602
        %2634 = vmatprep.subr.mxu0 0.0
        %2635 = vmatpush1.msra.mxu0 %v2603
        %2636 = vmatprep.subr.mxu0 0.0
        %2637 = vmatpush1.msra.mxu0 %v2604
        %2638 = vmatprep.subr.mxu0 0.0
        %2639 = vmatpush1.msra.mxu0 %v2605
        %2640 = vmatprep.subr.mxu0 0.0
        %2641 = vmatpush1.msra.mxu0 %v2606
        %2642 = vmatprep.subr.mxu0 0.0
        %2643 = vmatpush1.msra.mxu0 %v2607
        %2644 = vmatprep.subr.mxu0 0.0
        %2645 = vmatpush1.msra.mxu0 %v2608
        %2646 = vmatprep.subr.mxu0 0.0
        %2647 = vmatpush1.msra.mxu0 %v2609
        %2648 = vmatprep.subr.mxu0 0.0
        %2649 = vmatpush1.msra.mxu0 %v2610
        %2650 = vmatprep.subr.mxu0 0.0
        %2651 = vmatpush1.msra.mxu0 0.0
        %2652 = vmatprep.subr.mxu0 0.0
        %2653 = vmatpush1.msra.mxu0 0.0
        %2654 = vmatprep.subr.mxu0 0.0
        %2655 = vmatpush1.msra.mxu0 0.0
        %2656 = vmatprep.subr.mxu0 0.0
        %2657 = vmatpush1.msra.mxu0 0.0
        %2658 = vmatprep.subr.mxu0 0.0
        %2659 = vmatpush1.msra.mxu0 0.0
        %2660 = vmatprep.subr.mxu0 0.0
        %2661 = vmatpush1.msra.mxu0 0.0
        %2662 = vmatprep.subr.mxu0 0.0
        %2663 = vmatpush1.msra.mxu0 0.0
        %2664 = vmatprep.subr.mxu0 0.0
        %2665 = vmatpush1.msra.mxu0 0.0
        %2666 = vmatprep.subr.mxu0 0.0
        %2667 = vmatpush1.msra.mxu0 0.0
        %2668 = vmatprep.subr.mxu0 0.0
        %2669 = vmatpush1.msra.mxu0 0.0
        %2670 = vmatprep.subr.mxu0 0.0
        %2671 = vmatpush1.msra.mxu0 0.0
        %2672 = vmatprep.subr.mxu0 0.0
        %2673 = vmatpush1.msra.mxu0 0.0
        %2674 = vmatprep.subr.mxu0 0.0
        %2675 = vmatpush1.msra.mxu0 0.0
        %2676 = vmatprep.subr.mxu0 0.0
        %2677 = vmatpush1.msra.mxu0 0.0
        %2678 = vmatprep.subr.mxu0 0.0
        %2679 = vmatpush1.msra.mxu0 0.0
        %2680 = vmatprep.subr.mxu0 0.0
        %2681 = vmatpush1.msra.mxu0 0.0
        %2682 = vmatprep.mubr.f32.mxu0 0.0
        %2683 = vmatmul.mubr.f32.gmra.mrb[0].mxu0 %v2591
        %v2684 = vpop.f32.mrb[0].mxu0
        %v2685 = vadd.f32 %v2616, %v2684
        %v2686 = vpop.f32.mrb[0].mxu0
        %2687 = vmatprep.mubr.f32.mxu0 0.0
        %2688 = vmatmul.mubr.f32.gmra.mrb[0].mxu0 %v2592
        %v2689 = vpop.f32.mrb[0].mxu0
        %v2690 = vadd.f32 %v2616, %v2689
        %v2691 = vpop.f32.mrb[0].mxu0
        %2692 = vmatprep.mubr.f32.mxu0 0.0
        %2693 = vmatmul.mubr.f32.gmra.mrb[0].mxu0 %v2593
        %v2694 = vpop.f32.mrb[0].mxu0
        %v2695 = vadd.f32 %v2616, %v2694
        %v2696 = vpop.f32.mrb[0].mxu0
        %2697 = vmatprep.mubr.f32.mxu0 0.0
        %2698 = vmatmul.mubr.f32.gmra.mrb[0].mxu0 %v2594
        %v2699 = vpop.f32.mrb[0].mxu0
        %v2700 = vadd.f32 %v2616, %v2699
        %v2701 = vpop.f32.mrb[0].mxu0
        %2702 = vdwg.mxu0
        %v2703 = vadd.f32 %v2685, %v554
        %v2704 = vadd.f32 %v2690, %v555
        %v2705 = vadd.f32 %v2695, %v556
        %v2706 = vadd.f32 %v2700, %v557
        %2707 = vst.msk [vmem:[%s258] sm:$0xff] %vm558, %v2703
        %2708 = vst.msk [vmem:[%s258 + $0x8] sm:$0xff] %vm558, %v2704
        %2709 = vst.msk [vmem:[%s258 + $0x10] sm:$0xff] %vm558, %v2705
        %2710 = vst.msk [vmem:[%s258 + $0x18] sm:$0xff] %vm558, %v2706
        %s2711 = sand.u32 %s173, 1
        %s2712 = scalar_lea.sflag [#allocation4], %s2711
        %s2713 = sand.u32 %s173, 1
        %s2714 = smul.addr %s2713, 32
        %s2715 = scalar_lea.vmem [#allocation3], %s2714
        // Predicated region
        $region49: #{attention_module_forward.1} parent=43 // pred_check
          %p2716 = pneg %p183
        $region50: #{attention_module_forward.1} parent=43 // pred_check_branch
          %2718 = sbr.rel (%p2716) target = $region52
        $region51: #{attention_module_forward.1} parent=43 // pred_region
          %s2719 = smul.u32 4, %s25
          %s2721 = ssub.s32 512, 512
          %2722 = vsyncadd %s2712, %s2721
          %s2723 = smul.addr %s24, 8
          %s2724 = sadd.s32 %s2719, %s2723
          %s2725 = smul.addr %s2724, 128
          %s2726 = scalar_lea.hbm %s6, %s2725
          %s2727 = sshll.u32 %s2715, 4
          %s2728 = int_to_ptr.vmem [resolvable:$true] %s2727
          %2733 = dma.vmem_to_hbm [thread:$0]  %s2728, 512, %s2726, %s2712, 128, 128, 8
        $region52: #{attention_module_forward.1} parent=43 // pred_fallthru
          _
      $region44: #{attention_module_forward.1} parent=5 // pred_fallthru
        _
      %p2734 = scmp.le.s32.totalorder 2, %s15
      // Predicated region
      $region53: #{attention_module_forward.1} parent=5 // pred_check
        %p2735 = pneg %p2734
      $region54: #{attention_module_forward.1} parent=5 // pred_check_branch
        %2737 = sbr.rel (%p2735) target = $region56
      $region55: #{attention_module_forward.1} parent=5 // pred_region
        %s2738 = ssub.s32 %s15, 2
        // Predicated region
        $region57: #{attention_module_forward.1} parent=55 // pred_check
          %p2739 = pneg %p189
        $region58: #{attention_module_forward.1} parent=55 // pred_check_branch
          %2741 = sbr.rel (%p2739) target = $region60
        $region59: #{attention_module_forward.1} parent=55 // pred_region
          %s2742 = sand.u32 %s174, 1
          %s2743 = scalar_lea.sflag [#allocation4], %s2742
          %s2744 = sand.u32 %s174, 1
          %s2745 = smul.addr %s2744, 32
          %s2746 = scalar_lea.vmem [#allocation3], %s2745
          %2747 = dma.done %s2743, 512
        $region60: #{attention_module_forward.1} parent=55 // pred_fallthru
          _
      $region56: #{attention_module_forward.1} parent=5 // pred_fallthru
        _
    $region6: #{attention_module_forward.1} parent=1 // loop_footer
      %s19 = sadd.s32 1, %s15
    $region7: #{attention_module_forward.1} parent=1 // loop_footer_branch
      %14 = sbr.rel target = $region3
    $region8: #{attention_module_forward.1} parent=1 // loop_exit
      _
    %2748 = vsyncpa [#allocation4], 1
    %s2749 = scalar_lea.sflag [#allocation4], 1
    %2750 = vsyncpa %s2749, 1

</llo_original>
